<compile_context>
chip_gen: v5e
topology: v5e:2x2
jax: 0.10.0
libtpu: 0.0.40
codegen_flags: <defaults>
</compile_context>

<pallas_src>
import math
import jax
import jax.numpy as jnp
from jax.experimental import pallas as pl
from jax.experimental.pallas import tpu as pltpu

LANE = 128      # lane width of a vreg (last dim)
SUBLANE = 8     # sublane count of a vreg (second-to-last dim)


def _round_up(x, m):
    return ((x + m - 1) // m) * m


# --------------------------------------------------------------------------- kernel

def sae_kernel(x_ref,
               w1_ref, b1_ref,
               w2_ref, b2_ref,
               w3_ref, b3_ref,
               wa_ref, ba_ref,
               wb_ref, bb_ref,
               w4_ref, b4_ref,
               o_ref):
    x = x_ref[...].astype(jnp.float32)

    def dense(h, w_ref, b_ref):
        return jnp.dot(h, w_ref[...].astype(jnp.float32),
                       preferred_element_type=jnp.float32) + b_ref[...].astype(jnp.float32)

    sig = jax.nn.sigmoid

    # Padded lanes of h hold sigmoid(0)=0.5, but the corresponding (zero-padded)
    # rows of the next weight matrix kill them, so the result is exact.
    h = sig(dense(x, w1_ref, b1_ref))   # fc1:   n_feature -> n_hidden
    h = sig(dense(h, w2_ref, b2_ref))   # fc2:   n_hidden  -> n_reduce
    h = sig(dense(h, w3_ref, b3_ref))   # fc3:   n_reduce  -> n_hidden
    h = sig(dense(h, wa_ref, ba_ref))   # fc3.a: n_hidden  -> 20
    h = sig(dense(h, wb_ref, bb_ref))   # fc3.b: 20        -> 20
    y = dense(h, w4_ref, b4_ref)        # fc4:   20        -> n_feature (no activation)

    o_ref[...] = y.astype(o_ref.dtype)


# --------------------------------------------------------------------------- params

def init_linear(key, in_features, out_features, dtype=jnp.float32):
    """PyTorch-default-style uniform(-1/sqrt(in), 1/sqrt(in)) init, deterministic."""
    kw, kb = jax.random.split(key)
    bound = 1.0 / math.sqrt(in_features)
    # PyTorch stores W as [out, in]; we keep the transposed [in, out] for x @ W_t.
    w_t = jax.random.uniform(kw, (in_features, out_features), dtype, -bound, bound)
    b = jax.random.uniform(kb, (1, out_features), dtype, -bound, bound)
    return w_t, b


def make_sae_params(key, n_feature, n_hidden=20, n_reduce=10):
    keys = jax.random.split(key, 6)
    p = {}
    p["w1"], p["b1"] = init_linear(keys[0], n_feature, n_hidden)
    p["w2"], p["b2"] = init_linear(keys[1], n_hidden, n_reduce)
    p["w3"], p["b3"] = init_linear(keys[2], n_reduce, n_hidden)
    p["wa"], p["ba"] = init_linear(keys[3], n_hidden, 20)      # fc3.a
    p["wb"], p["bb"] = init_linear(keys[4], 20, 20)            # fc3.b
    p["w4"], p["b4"] = init_linear(keys[5], 20, n_feature)     # fc4
    return p


def _pad_params_to_lanes(params):
    """Zero-pad every weight's dims and every bias's out dim to multiples of 128."""
    def pad_w(w):  # [in, out]
        i, o = w.shape
        return jnp.pad(w, ((0, _round_up(i, LANE) - i), (0, _round_up(o, LANE) - o)))

    def pad_b(b):  # [1, out]
        _, o = b.shape
        return jnp.pad(b, ((0, 0), (0, _round_up(o, LANE) - o)))

    return {k: (pad_w(v) if k.startswith("w") else pad_b(v)) for k, v in params.items()}


# --------------------------------------------------------------------------- wrapper

def _choose_tb(B, F_pad):
    """Pick a large batch tile (multiple of 8) that amortizes step overhead,
    keeps >= 2 grid steps when B allows it, and stays far inside the VMEM budget."""
    budget = 8 * 1024 * 1024                      # bytes for x/out pipeline buffers
    per_row = 2 * 2 * F_pad * 4                   # (x + out) x double-buffer, f32
    cap = max(SUBLANE, (budget // per_row) // SUBLANE * SUBLANE)
    tb = min(1024, cap)
    half = _round_up(max(B // 2, 1), SUBLANE)     # keep >= 2 steps for v7x megacore
    tb = max(SUBLANE, min(tb, half))
    return _round_up(tb, SUBLANE)


def sae_forward(x, params, *, tb=None):
    B, n_feature = x.shape
    F_pad = _round_up(n_feature, LANE)

    if tb is None:
        tb = _choose_tb(B, F_pad)
    tb = _round_up(max(tb, SUBLANE), SUBLANE)

    B_pad = _round_up(B, tb)

    # Lane-dense, tile-aligned input; zero rows/cols are exact and sliced away below.
    x_p = jnp.pad(x, ((0, B_pad - B), (0, F_pad - n_feature)))

    pp = _pad_params_to_lanes(params)
    param_order = ["w1", "b1", "w2", "b2", "w3", "b3",
                   "wa", "ba", "wb", "bb", "w4", "b4"]
    param_arrays = [pp[k] for k in param_order]

    def full_spec(arr):
        # Whole-array block with a constant index_map -> DMA'd once, stays resident.
        nd = arr.ndim
        return pl.BlockSpec(arr.shape, lambda i, _nd=nd: (0,) * _nd)

    in_specs = [pl.BlockSpec((tb, F_pad), lambda i: (i, 0))]
    in_specs += [full_spec(a) for a in param_arrays]
    out_spec = pl.BlockSpec((tb, F_pad), lambda i: (i, 0))

    y_pad = pl.pallas_call(
        sae_kernel,
        out_shape=jax.ShapeDtypeStruct((B_pad, F_pad), x.dtype),
        grid_spec=pltpu.PrefetchScalarGridSpec(
            num_scalar_prefetch=0,
            grid=(B_pad // tb,),
            in_specs=in_specs,
            out_specs=out_spec,
        ),
        compiler_params=pltpu.CompilerParams(
            dimension_semantics=("parallel",),
            vmem_limit_bytes=32 * 1024 * 1024,
        ),
    )(x_p, *param_arrays)

    return y_pad[:B, :n_feature]


def sae_forward_ref(x, params):
    """Pure-JAX reference for correctness check."""
    sig = jax.nn.sigmoid
    h = sig(x @ params["w1"] + params["b1"])
    h = sig(h @ params["w2"] + params["b2"])
    h = sig(h @ params["w3"] + params["b3"])
    h = sig(h @ params["wa"] + params["ba"])
    h = sig(h @ params["wb"] + params["bb"])
    return h @ params["w4"] + params["b4"]


if __name__ == "__main__":
    # Small synthetic shapes: n_feature plays the role of nb_prod.
    B = 256
    n_feature = 64
    n_hidden = 20
    n_reduce = 10

    key = jax.random.PRNGKey(0)
    kx, kp = jax.random.split(key)
    x = jax.random.normal(kx, (B, n_feature), dtype=jnp.float32)
    params = make_sae_params(kp, n_feature, n_hidden, n_reduce)

    out = sae_forward(x, params)            # tb auto-chosen (128 here -> 2 grid steps)
    out = jax.block_until_ready(out)

    ref = sae_forward_ref(x, params)
    assert out.shape == (B, n_feature)
    assert jnp.allclose(out, ref, atol=1e-5, rtol=1e-5), "mismatch vs reference"

    print("KERNEL_OK")
</pallas_src>

<mosaic_0001>
module attributes {stable_mosaic.version = 11 : i64} {
  func.func @sae_kernel(%arg0: i32, %arg1: memref<128x128xf32, #tpu.memory_space<vmem>>, %arg2: memref<128x128xf32, #tpu.memory_space<vmem>>, %arg3: memref<1x128xf32, #tpu.memory_space<vmem>>, %arg4: memref<128x128xf32, #tpu.memory_space<vmem>>, %arg5: memref<1x128xf32, #tpu.memory_space<vmem>>, %arg6: memref<128x128xf32, #tpu.memory_space<vmem>>, %arg7: memref<1x128xf32, #tpu.memory_space<vmem>>, %arg8: memref<128x128xf32, #tpu.memory_space<vmem>>, %arg9: memref<1x128xf32, #tpu.memory_space<vmem>>, %arg10: memref<128x128xf32, #tpu.memory_space<vmem>>, %arg11: memref<1x128xf32, #tpu.memory_space<vmem>>, %arg12: memref<128x128xf32, #tpu.memory_space<vmem>>, %arg13: memref<1x128xf32, #tpu.memory_space<vmem>>, %arg14: memref<128x128xf32, #tpu.memory_space<vmem>>) attributes {dimension_semantics = [#tpu.dimension_semantics<parallel>], iteration_bounds = array<i64: 2>, scalar_prefetch = 0 : i64, scratch_operands = 0 : i64, tpu.core_type = #tpu.core_type<tc>, window_params = [{transform_indices = @transform_0, window_bounds = array<i64: 128, 128>}, {pipeline_mode = #tpu.pipeline_mode<synchronous>, transform_indices = @transform_1, window_bounds = array<i64: 128, 128>}, {pipeline_mode = #tpu.pipeline_mode<synchronous>, transform_indices = @transform_2, window_bounds = array<i64: 1, 128>}, {pipeline_mode = #tpu.pipeline_mode<synchronous>, transform_indices = @transform_3, window_bounds = array<i64: 128, 128>}, {pipeline_mode = #tpu.pipeline_mode<synchronous>, transform_indices = @transform_4, window_bounds = array<i64: 1, 128>}, {pipeline_mode = #tpu.pipeline_mode<synchronous>, transform_indices = @transform_5, window_bounds = array<i64: 128, 128>}, {pipeline_mode = #tpu.pipeline_mode<synchronous>, transform_indices = @transform_6, window_bounds = array<i64: 1, 128>}, {pipeline_mode = #tpu.pipeline_mode<synchronous>, transform_indices = @transform_7, window_bounds = array<i64: 128, 128>}, {pipeline_mode = #tpu.pipeline_mode<synchronous>, transform_indices = @transform_8, window_bounds = array<i64: 1, 128>}, {pipeline_mode = #tpu.pipeline_mode<synchronous>, transform_indices = @transform_9, window_bounds = array<i64: 128, 128>}, {pipeline_mode = #tpu.pipeline_mode<synchronous>, transform_indices = @transform_10, window_bounds = array<i64: 1, 128>}, {pipeline_mode = #tpu.pipeline_mode<synchronous>, transform_indices = @transform_11, window_bounds = array<i64: 128, 128>}, {pipeline_mode = #tpu.pipeline_mode<synchronous>, transform_indices = @transform_12, window_bounds = array<i64: 1, 128>}, {transform_indices = @transform_13, window_bounds = array<i64: 128, 128>}]} {
    %c0 = arith.constant 0 : index
    %c0_0 = arith.constant 0 : index
    %0 = vector.load %arg1[%c0, %c0_0] : memref<128x128xf32, #tpu.memory_space<vmem>>, vector<128x128xf32>
    %c0_1 = arith.constant 0 : index
    %c0_2 = arith.constant 0 : index
    %1 = vector.load %arg2[%c0_1, %c0_2] : memref<128x128xf32, #tpu.memory_space<vmem>>, vector<128x128xf32>
    %cst = arith.constant dense<0.000000e+00> : vector<128x128xf32>
    %2 = tpu.matmul %0, %1, %cst {dimension_numbers = #tpu.dot_dimension_numbers<[1], [0], [0], [1], [0, 0, 1, 1], [], []>} : vector<128x128xf32>, vector<128x128xf32>, vector<128x128xf32> -> vector<128x128xf32>
    %c0_3 = arith.constant 0 : index
    %c0_4 = arith.constant 0 : index
    %3 = vector.load %arg3[%c0_3, %c0_4] : memref<1x128xf32, #tpu.memory_space<vmem>>, vector<1x128xf32>
    %4 = vector.broadcast %3 : vector<1x128xf32> to vector<128x128xf32>
    %5 = arith.addf %2, %4 : vector<128x128xf32>
    %6 = arith.negf %5 : vector<128x128xf32>
    %7 = math.exp %6 : vector<128x128xf32>
    %cst_5 = arith.constant 1.000000e+00 : f32
    %8 = vector.broadcast %cst_5 : f32 to vector<128x128xf32>
    %9 = arith.addf %8, %7 : vector<128x128xf32>
    %10 = arith.divf %8, %9 : vector<128x128xf32>
    %c0_6 = arith.constant 0 : index
    %c0_7 = arith.constant 0 : index
    %11 = vector.load %arg4[%c0_6, %c0_7] : memref<128x128xf32, #tpu.memory_space<vmem>>, vector<128x128xf32>
    %cst_8 = arith.constant dense<0.000000e+00> : vector<128x128xf32>
    %12 = tpu.matmul %10, %11, %cst_8 {dimension_numbers = #tpu.dot_dimension_numbers<[1], [0], [0], [1], [0, 0, 1, 1], [], []>} : vector<128x128xf32>, vector<128x128xf32>, vector<128x128xf32> -> vector<128x128xf32>
    %c0_9 = arith.constant 0 : index
    %c0_10 = arith.constant 0 : index
    %13 = vector.load %arg5[%c0_9, %c0_10] : memref<1x128xf32, #tpu.memory_space<vmem>>, vector<1x128xf32>
    %14 = vector.broadcast %13 : vector<1x128xf32> to vector<128x128xf32>
    %15 = arith.addf %12, %14 : vector<128x128xf32>
    %16 = arith.negf %15 : vector<128x128xf32>
    %17 = math.exp %16 : vector<128x128xf32>
    %cst_11 = arith.constant 1.000000e+00 : f32
    %18 = vector.broadcast %cst_11 : f32 to vector<128x128xf32>
    %19 = arith.addf %18, %17 : vector<128x128xf32>
    %20 = arith.divf %18, %19 : vector<128x128xf32>
    %c0_12 = arith.constant 0 : index
    %c0_13 = arith.constant 0 : index
    %21 = vector.load %arg6[%c0_12, %c0_13] : memref<128x128xf32, #tpu.memory_space<vmem>>, vector<128x128xf32>
    %cst_14 = arith.constant dense<0.000000e+00> : vector<128x128xf32>
    %22 = tpu.matmul %20, %21, %cst_14 {dimension_numbers = #tpu.dot_dimension_numbers<[1], [0], [0], [1], [0, 0, 1, 1], [], []>} : vector<128x128xf32>, vector<128x128xf32>, vector<128x128xf32> -> vector<128x128xf32>
    %c0_15 = arith.constant 0 : index
    %c0_16 = arith.constant 0 : index
    %23 = vector.load %arg7[%c0_15, %c0_16] : memref<1x128xf32, #tpu.memory_space<vmem>>, vector<1x128xf32>
    %24 = vector.broadcast %23 : vector<1x128xf32> to vector<128x128xf32>
    %25 = arith.addf %22, %24 : vector<128x128xf32>
    %26 = arith.negf %25 : vector<128x128xf32>
    %27 = math.exp %26 : vector<128x128xf32>
    %cst_17 = arith.constant 1.000000e+00 : f32
    %28 = vector.broadcast %cst_17 : f32 to vector<128x128xf32>
    %29 = arith.addf %28, %27 : vector<128x128xf32>
    %30 = arith.divf %28, %29 : vector<128x128xf32>
    %c0_18 = arith.constant 0 : index
    %c0_19 = arith.constant 0 : index
    %31 = vector.load %arg8[%c0_18, %c0_19] : memref<128x128xf32, #tpu.memory_space<vmem>>, vector<128x128xf32>
    %cst_20 = arith.constant dense<0.000000e+00> : vector<128x128xf32>
    %32 = tpu.matmul %30, %31, %cst_20 {dimension_numbers = #tpu.dot_dimension_numbers<[1], [0], [0], [1], [0, 0, 1, 1], [], []>} : vector<128x128xf32>, vector<128x128xf32>, vector<128x128xf32> -> vector<128x128xf32>
    %c0_21 = arith.constant 0 : index
    %c0_22 = arith.constant 0 : index
    %33 = vector.load %arg9[%c0_21, %c0_22] : memref<1x128xf32, #tpu.memory_space<vmem>>, vector<1x128xf32>
    %34 = vector.broadcast %33 : vector<1x128xf32> to vector<128x128xf32>
    %35 = arith.addf %32, %34 : vector<128x128xf32>
    %36 = arith.negf %35 : vector<128x128xf32>
    %37 = math.exp %36 : vector<128x128xf32>
    %cst_23 = arith.constant 1.000000e+00 : f32
    %38 = vector.broadcast %cst_23 : f32 to vector<128x128xf32>
    %39 = arith.addf %38, %37 : vector<128x128xf32>
    %40 = arith.divf %38, %39 : vector<128x128xf32>
    %c0_24 = arith.constant 0 : index
    %c0_25 = arith.constant 0 : index
    %41 = vector.load %arg10[%c0_24, %c0_25] : memref<128x128xf32, #tpu.memory_space<vmem>>, vector<128x128xf32>
    %cst_26 = arith.constant dense<0.000000e+00> : vector<128x128xf32>
    %42 = tpu.matmul %40, %41, %cst_26 {dimension_numbers = #tpu.dot_dimension_numbers<[1], [0], [0], [1], [0, 0, 1, 1], [], []>} : vector<128x128xf32>, vector<128x128xf32>, vector<128x128xf32> -> vector<128x128xf32>
    %c0_27 = arith.constant 0 : index
    %c0_28 = arith.constant 0 : index
    %43 = vector.load %arg11[%c0_27, %c0_28] : memref<1x128xf32, #tpu.memory_space<vmem>>, vector<1x128xf32>
    %44 = vector.broadcast %43 : vector<1x128xf32> to vector<128x128xf32>
    %45 = arith.addf %42, %44 : vector<128x128xf32>
    %46 = arith.negf %45 : vector<128x128xf32>
    %47 = math.exp %46 : vector<128x128xf32>
    %cst_29 = arith.constant 1.000000e+00 : f32
    %48 = vector.broadcast %cst_29 : f32 to vector<128x128xf32>
    %49 = arith.addf %48, %47 : vector<128x128xf32>
    %50 = arith.divf %48, %49 : vector<128x128xf32>
    %c0_30 = arith.constant 0 : index
    %c0_31 = arith.constant 0 : index
    %51 = vector.load %arg12[%c0_30, %c0_31] : memref<128x128xf32, #tpu.memory_space<vmem>>, vector<128x128xf32>
    %cst_32 = arith.constant dense<0.000000e+00> : vector<128x128xf32>
    %52 = tpu.matmul %50, %51, %cst_32 {dimension_numbers = #tpu.dot_dimension_numbers<[1], [0], [0], [1], [0, 0, 1, 1], [], []>} : vector<128x128xf32>, vector<128x128xf32>, vector<128x128xf32> -> vector<128x128xf32>
    %c0_33 = arith.constant 0 : index
    %c0_34 = arith.constant 0 : index
    %53 = vector.load %arg13[%c0_33, %c0_34] : memref<1x128xf32, #tpu.memory_space<vmem>>, vector<1x128xf32>
    %54 = vector.broadcast %53 : vector<1x128xf32> to vector<128x128xf32>
    %55 = arith.addf %52, %54 : vector<128x128xf32>
    %c0_35 = arith.constant 0 : index
    %c0_36 = arith.constant 0 : index
    %56 = vector.load %arg14[%c0_35, %c0_36] : memref<128x128xf32, #tpu.memory_space<vmem>>, vector<128x128xf32>
    tpu.vector_store %arg14[%c0_35, %c0_36], %55 {strides = array<i32>} : memref<128x128xf32, #tpu.memory_space<vmem>>, vector<128x128xf32>,
    return
  }
  func.func @transform_0(%arg0: i32) -> (i32, i32) {
    %c0_i32 = arith.constant 0 : i32
    %c0_i32_0 = arith.constant 0 : i32
    return %arg0, %c0_i32 : i32, i32
  }
  func.func @transform_1(%arg0: i32) -> (i32, i32) {
    %c0_i32 = arith.constant 0 : i32
    %c0_i32_0 = arith.constant 0 : i32
    %c0_i32_1 = arith.constant 0 : i32
    return %c0_i32, %c0_i32_0 : i32, i32
  }
  func.func @transform_2(%arg0: i32) -> (i32, i32) {
    %c0_i32 = arith.constant 0 : i32
    %c0_i32_0 = arith.constant 0 : i32
    %c0_i32_1 = arith.constant 0 : i32
    return %c0_i32, %c0_i32_0 : i32, i32
  }
  func.func @transform_3(%arg0: i32) -> (i32, i32) {
    %c0_i32 = arith.constant 0 : i32
    %c0_i32_0 = arith.constant 0 : i32
    %c0_i32_1 = arith.constant 0 : i32
    return %c0_i32, %c0_i32_0 : i32, i32
  }
  func.func @transform_4(%arg0: i32) -> (i32, i32) {
    %c0_i32 = arith.constant 0 : i32
    %c0_i32_0 = arith.constant 0 : i32
    %c0_i32_1 = arith.constant 0 : i32
    return %c0_i32, %c0_i32_0 : i32, i32
  }
  func.func @transform_5(%arg0: i32) -> (i32, i32) {
    %c0_i32 = arith.constant 0 : i32
    %c0_i32_0 = arith.constant 0 : i32
    %c0_i32_1 = arith.constant 0 : i32
    return %c0_i32, %c0_i32_0 : i32, i32
  }
  func.func @transform_6(%arg0: i32) -> (i32, i32) {
    %c0_i32 = arith.constant 0 : i32
    %c0_i32_0 = arith.constant 0 : i32
    %c0_i32_1 = arith.constant 0 : i32
    return %c0_i32, %c0_i32_0 : i32, i32
  }
  func.func @transform_7(%arg0: i32) -> (i32, i32) {
    %c0_i32 = arith.constant 0 : i32
    %c0_i32_0 = arith.constant 0 : i32
    %c0_i32_1 = arith.constant 0 : i32
    return %c0_i32, %c0_i32_0 : i32, i32
  }
  func.func @transform_8(%arg0: i32) -> (i32, i32) {
    %c0_i32 = arith.constant 0 : i32
    %c0_i32_0 = arith.constant 0 : i32
    %c0_i32_1 = arith.constant 0 : i32
    return %c0_i32, %c0_i32_0 : i32, i32
  }
  func.func @transform_9(%arg0: i32) -> (i32, i32) {
    %c0_i32 = arith.constant 0 : i32
    %c0_i32_0 = arith.constant 0 : i32
    %c0_i32_1 = arith.constant 0 : i32
    return %c0_i32, %c0_i32_0 : i32, i32
  }
  func.func @transform_10(%arg0: i32) -> (i32, i32) {
    %c0_i32 = arith.constant 0 : i32
    %c0_i32_0 = arith.constant 0 : i32
    %c0_i32_1 = arith.constant 0 : i32
    return %c0_i32, %c0_i32_0 : i32, i32
  }
  func.func @transform_11(%arg0: i32) -> (i32, i32) {
    %c0_i32 = arith.constant 0 : i32
    %c0_i32_0 = arith.constant 0 : i32
    %c0_i32_1 = arith.constant 0 : i32
    return %c0_i32, %c0_i32_0 : i32, i32
  }
  func.func @transform_12(%arg0: i32) -> (i32, i32) {
    %c0_i32 = arith.constant 0 : i32
    %c0_i32_0 = arith.constant 0 : i32
    %c0_i32_1 = arith.constant 0 : i32
    return %c0_i32, %c0_i32_0 : i32, i32
  }
  func.func @transform_13(%arg0: i32) -> (i32, i32) {
    %c0_i32 = arith.constant 0 : i32
    %c0_i32_0 = arith.constant 0 : i32
    return %arg0, %c0_i32 : i32, i32
  }
}

</mosaic_0001>

<llo_original>
// kernel: tpu_custom_call.1
$region0: #{tpu_custom_call.1}
  #allocation0 [shape = 'u32[]', space=smem, size = 0x4, offset = 0x4, fixed_abs, tag = 'smem constant byte address 0x4 - core index']
  #allocation1 [shape = 'u32[72,128]{1,0:T(1,128)}', space=vmem, size = 0x9000, scoped, tag = 'internal scratch']
  %s0 = inlined_call_operand.hbm [shape: f32[256,128], index: 0, kind: input, shape index: {}]
  %s1 = inlined_call_operand.hbm [shape: f32[128,128], index: 1, kind: input, shape index: {}]
  %s2 = inlined_call_operand.vmem [shape: f32[1,128], index: 2, kind: input, shape index: {}]
  %s3 = inlined_call_operand.hbm [shape: f32[128,128], index: 3, kind: input, shape index: {}]
  %s4 = inlined_call_operand.vmem [shape: f32[1,128], index: 4, kind: input, shape index: {}]
  %s5 = inlined_call_operand.hbm [shape: f32[128,128], index: 5, kind: input, shape index: {}]
  %s6 = inlined_call_operand.vmem [shape: f32[1,128], index: 6, kind: input, shape index: {}]
  %s7 = inlined_call_operand.hbm [shape: f32[128,128], index: 7, kind: input, shape index: {}]
  %s8 = inlined_call_operand.vmem [shape: f32[1,128], index: 8, kind: input, shape index: {}]
  %s9 = inlined_call_operand.hbm [shape: f32[128,128], index: 9, kind: input, shape index: {}]
  %s10 = inlined_call_operand.vmem [shape: f32[1,128], index: 10, kind: input, shape index: {}]
  %s11 = inlined_call_operand.hbm [shape: f32[128,128], index: 11, kind: input, shape index: {}]
  %s12 = inlined_call_operand.vmem [shape: f32[1,128], index: 12, kind: input, shape index: {}]
  %s13 = inlined_call_operand.hbm [shape: f32[256,128], index: 13, kind: output, shape index: {}]
  %s14 = sld [smem:[#allocation0]]
  $region113: #{tpu_custom_call.1} parent=0
    _
  %s16 = ssub.s32 1, %s14
  %s17 = scalar_select 0, %s16, %s14
  $region1: #{tpu_custom_call.1} parent=0
    #allocation2 [shape = 'u8[131072]{0}', space=vmem, size = 0x20000, scoped, tag = 'input window, operand 0']
    #allocation3 [shape = 's32[2]{0}', space=sflag, size = 0x8, scoped, tag = 'scoped memory for tpu_custom_call.1']
    #allocation4 [shape = 's32[2]{0}', space=sflag, size = 0x8, scoped, tag = 'scoped memory for tpu_custom_call.1']
    #allocation5 [shape = 'u8[65536]{0}', space=vmem, size = 0x10000, scoped, tag = 'input window, operand 1, single buffered']
    #allocation6 [shape = 's32[1]{0}', space=sflag, size = 0x4, scoped, tag = 'scoped memory for tpu_custom_call.1']
    #allocation7 [shape = 'u8[65536]{0}', space=vmem, size = 0x10000, scoped, tag = 'input window, operand 3, single buffered']
    #allocation8 [shape = 'u8[65536]{0}', space=vmem, size = 0x10000, scoped, tag = 'input window, operand 5, single buffered']
    #allocation9 [shape = 's32[1]{0}', space=sflag, size = 0x4, scoped, tag = 'scoped memory for tpu_custom_call.1']
    #allocation10 [shape = 'u8[65536]{0}', space=vmem, size = 0x10000, scoped, tag = 'input window, operand 7, single buffered']
    #allocation11 [shape = 'u8[65536]{0}', space=vmem, size = 0x10000, scoped, tag = 'input window, operand 9, single buffered']
    #allocation12 [shape = 's32[1]{0}', space=sflag, size = 0x4, scoped, tag = 'scoped memory for tpu_custom_call.1']
    #allocation13 [shape = 'u8[65536]{0}', space=vmem, size = 0x10000, scoped, tag = 'input window, operand 11, single buffered']
    #allocation14 [shape = 'u8[131072]{0}', space=vmem, size = 0x20000, scoped, tag = 'output window, operand 0']
    %18 = vsyncpa [#allocation3], 0
    %s19 = scalar_lea.sflag [#allocation3], 1
    %20 = vsyncpa %s19, 0
    %21 = vsyncpa [#allocation6], 0
    %22 = vsyncpa [#allocation9], 0
    %23 = vsyncpa [#allocation12], 0
    %24 = vsyncpa [#allocation4], 0
    %s25 = scalar_lea.sflag [#allocation4], 1
    %26 = vsyncpa %s25, 0
    loop: start=0, step=1, limit=4
    $region2: #{tpu_custom_call.1} parent=1 // loop_pre_header
      _
    $region3: #{tpu_custom_call.1} parent=1 // loop_header
      %s28 = sphi 0, %s32
      %p29 = scmp.ge.s32.totalorder %s28, 4
      %s38 = sphi 0, %s40
      %s41 = sphi 0, %s38
      %s42 = sphi 0, %s41
      %s58 = sphi 0, %s42
      %s62 = sphi 0, %s62
      %s64 = sphi 0, %s62
      %s65 = sphi 0, %s64
      %s79 = sphi 0, %s65
      %s83 = sphi 0, %s83
      %s85 = sphi 0, %s83
      %s86 = sphi 0, %s85
      %s100 = sphi 0, %s86
      %s104 = sphi 0, %s104
      %s106 = sphi 0, %s104
      %s107 = sphi 0, %s106
      %s121 = sphi 0, %s107
      %s125 = sphi 0, %s125
      %s127 = sphi 0, %s125
      %s128 = sphi 0, %s127
      %s142 = sphi 0, %s128
      %s146 = sphi 0, %s146
      %s148 = sphi 0, %s146
      %s149 = sphi 0, %s148
      %s163 = sphi 0, %s149
      %s167 = sphi 0, %s167
      %s169 = sphi 0, %s167
      %s170 = sphi 0, %s169
      %s184 = sphi 0, %s170
      %s188 = sphi 0, %s188
      %s190 = sphi 0, %s188
      %s191 = sphi 0, %s190
      %s205 = sphi 0, %s191
      %s209 = sphi 0, %s209
      %s211 = sphi 0, %s209
      %s212 = sphi 0, %s211
      %s226 = sphi 0, %s212
      %s230 = sphi 0, %s230
      %s232 = sphi 0, %s230
      %s233 = sphi 0, %s232
      %s247 = sphi 0, %s233
      %s251 = sphi 0, %s251
      %s253 = sphi 0, %s251
      %s254 = sphi 0, %s253
      %s268 = sphi 0, %s254
      %s272 = sphi 0, %s272
      %s274 = sphi 0, %s272
      %s275 = sphi 0, %s274
      %s289 = sphi 0, %s275
      %s293 = sphi 0, %s293
      %s295 = sphi 0, %s293
      %s296 = sphi 0, %s295
      %s310 = sphi 0, %s296
      %s316 = sphi 0, %s318
      %s319 = sphi 0, %s316
      %s320 = sphi 0, %s319
      %s336 = sphi 0, %s320
    $region4: #{tpu_custom_call.1} parent=1 // loop_header_branch
      %31 = sbr.rel (%p29) target = $region8
    $region5: #{tpu_custom_call.1} parent=1 // loop_body
      %s33 = ssub.s32 %s28, 1
      %s34 = ssub.s32 %s28, 2
      %s35 = sadd.s32 %s28, 1
      %s36 = ssub.s32 %s28, %s35
      %p37 = scmp.eq.s32.totalorder %s36, 0
      %s39 = sadd.s32 %s38, 1
      %s40 = scalar_select %p37, %s38, %s39
      %p43 = pneg %p37
      %p44 = scmp.eq.s32.totalorder %s28, 1
      %p45 = por %p43, %p44
      %p46 = scmp.ne.s32.totalorder %s38, %s41
      %p47 = scmp.eq.s32.totalorder %s28, 0
      %p48 = por %p46, %p47
      %p49 = scmp.ne.s32.totalorder %s38, %s41
      %p50 = scmp.eq.s32.totalorder %s33, 1
      %p51 = por %p49, %p50
      %p52 = scmp.ne.s32.totalorder %s41, %s42
      %p53 = scmp.eq.s32.totalorder %s33, 0
      %p54 = por %p52, %p53
      %p55 = scmp.ne.s32.totalorder %s41, %s42
      %p56 = scmp.eq.s32.totalorder %s34, 1
      %p57 = por %p55, %p56
      %p59 = scmp.ne.s32.totalorder %s42, %s58
      %p60 = scmp.eq.s32.totalorder %s34, 0
      %p61 = por %p59, %p60
      %s63 = sadd.s32 %s62, 1
      %p66 = scmp.eq.s32.totalorder %s28, 1
      %p67 = scmp.ne.s32.totalorder %s62, %s64
      %p68 = scmp.eq.s32.totalorder %s28, 0
      %p69 = por %p67, %p68
      %p70 = scmp.ne.s32.totalorder %s62, %s64
      %p71 = scmp.eq.s32.totalorder %s33, 1
      %p72 = por %p70, %p71
      %p73 = scmp.ne.s32.totalorder %s64, %s65
      %p74 = scmp.eq.s32.totalorder %s33, 0
      %p75 = por %p73, %p74
      %p76 = scmp.ne.s32.totalorder %s64, %s65
      %p77 = scmp.eq.s32.totalorder %s34, 1
      %p78 = por %p76, %p77
      %p80 = scmp.ne.s32.totalorder %s65, %s79
      %p81 = scmp.eq.s32.totalorder %s34, 0
      %p82 = por %p80, %p81
      %s84 = sadd.s32 %s83, 1
      %p87 = scmp.eq.s32.totalorder %s28, 1
      %p88 = scmp.ne.s32.totalorder %s83, %s85
      %p89 = scmp.eq.s32.totalorder %s28, 0
      %p90 = por %p88, %p89
      %p91 = scmp.ne.s32.totalorder %s83, %s85
      %p92 = scmp.eq.s32.totalorder %s33, 1
      %p93 = por %p91, %p92
      %p94 = scmp.ne.s32.totalorder %s85, %s86
      %p95 = scmp.eq.s32.totalorder %s33, 0
      %p96 = por %p94, %p95
      %p97 = scmp.ne.s32.totalorder %s85, %s86
      %p98 = scmp.eq.s32.totalorder %s34, 1
      %p99 = por %p97, %p98
      %p101 = scmp.ne.s32.totalorder %s86, %s100
      %p102 = scmp.eq.s32.totalorder %s34, 0
      %p103 = por %p101, %p102
      %s105 = sadd.s32 %s104, 1
      %p108 = scmp.eq.s32.totalorder %s28, 1
      %p109 = scmp.ne.s32.totalorder %s104, %s106
      %p110 = scmp.eq.s32.totalorder %s28, 0
      %p111 = por %p109, %p110
      %p112 = scmp.ne.s32.totalorder %s104, %s106
      %p113 = scmp.eq.s32.totalorder %s33, 1
      %p114 = por %p112, %p113
      %p115 = scmp.ne.s32.totalorder %s106, %s107
      %p116 = scmp.eq.s32.totalorder %s33, 0
      %p117 = por %p115, %p116
      %p118 = scmp.ne.s32.totalorder %s106, %s107
      %p119 = scmp.eq.s32.totalorder %s34, 1
      %p120 = por %p118, %p119
      %p122 = scmp.ne.s32.totalorder %s107, %s121
      %p123 = scmp.eq.s32.totalorder %s34, 0
      %p124 = por %p122, %p123
      %s126 = sadd.s32 %s125, 1
      %p129 = scmp.eq.s32.totalorder %s28, 1
      %p130 = scmp.ne.s32.totalorder %s125, %s127
      %p131 = scmp.eq.s32.totalorder %s28, 0
      %p132 = por %p130, %p131
      %p133 = scmp.ne.s32.totalorder %s125, %s127
      %p134 = scmp.eq.s32.totalorder %s33, 1
      %p135 = por %p133, %p134
      %p136 = scmp.ne.s32.totalorder %s127, %s128
      %p137 = scmp.eq.s32.totalorder %s33, 0
      %p138 = por %p136, %p137
      %p139 = scmp.ne.s32.totalorder %s127, %s128
      %p140 = scmp.eq.s32.totalorder %s34, 1
      %p141 = por %p139, %p140
      %p143 = scmp.ne.s32.totalorder %s128, %s142
      %p144 = scmp.eq.s32.totalorder %s34, 0
      %p145 = por %p143, %p144
      %s147 = sadd.s32 %s146, 1
      %p150 = scmp.eq.s32.totalorder %s28, 1
      %p151 = scmp.ne.s32.totalorder %s146, %s148
      %p152 = scmp.eq.s32.totalorder %s28, 0
      %p153 = por %p151, %p152
      %p154 = scmp.ne.s32.totalorder %s146, %s148
      %p155 = scmp.eq.s32.totalorder %s33, 1
      %p156 = por %p154, %p155
      %p157 = scmp.ne.s32.totalorder %s148, %s149
      %p158 = scmp.eq.s32.totalorder %s33, 0
      %p159 = por %p157, %p158
      %p160 = scmp.ne.s32.totalorder %s148, %s149
      %p161 = scmp.eq.s32.totalorder %s34, 1
      %p162 = por %p160, %p161
      %p164 = scmp.ne.s32.totalorder %s149, %s163
      %p165 = scmp.eq.s32.totalorder %s34, 0
      %p166 = por %p164, %p165
      %s168 = sadd.s32 %s167, 1
      %p171 = scmp.eq.s32.totalorder %s28, 1
      %p172 = scmp.ne.s32.totalorder %s167, %s169
      %p173 = scmp.eq.s32.totalorder %s28, 0
      %p174 = por %p172, %p173
      %p175 = scmp.ne.s32.totalorder %s167, %s169
      %p176 = scmp.eq.s32.totalorder %s33, 1
      %p177 = por %p175, %p176
      %p178 = scmp.ne.s32.totalorder %s169, %s170
      %p179 = scmp.eq.s32.totalorder %s33, 0
      %p180 = por %p178, %p179
      %p181 = scmp.ne.s32.totalorder %s169, %s170
      %p182 = scmp.eq.s32.totalorder %s34, 1
      %p183 = por %p181, %p182
      %p185 = scmp.ne.s32.totalorder %s170, %s184
      %p186 = scmp.eq.s32.totalorder %s34, 0
      %p187 = por %p185, %p186
      %s189 = sadd.s32 %s188, 1
      %p192 = scmp.eq.s32.totalorder %s28, 1
      %p193 = scmp.ne.s32.totalorder %s188, %s190
      %p194 = scmp.eq.s32.totalorder %s28, 0
      %p195 = por %p193, %p194
      %p196 = scmp.ne.s32.totalorder %s188, %s190
      %p197 = scmp.eq.s32.totalorder %s33, 1
      %p198 = por %p196, %p197
      %p199 = scmp.ne.s32.totalorder %s190, %s191
      %p200 = scmp.eq.s32.totalorder %s33, 0
      %p201 = por %p199, %p200
      %p202 = scmp.ne.s32.totalorder %s190, %s191
      %p203 = scmp.eq.s32.totalorder %s34, 1
      %p204 = por %p202, %p203
      %p206 = scmp.ne.s32.totalorder %s191, %s205
      %p207 = scmp.eq.s32.totalorder %s34, 0
      %p208 = por %p206, %p207
      %s210 = sadd.s32 %s209, 1
      %p213 = scmp.eq.s32.totalorder %s28, 1
      %p214 = scmp.ne.s32.totalorder %s209, %s211
      %p215 = scmp.eq.s32.totalorder %s28, 0
      %p216 = por %p214, %p215
      %p217 = scmp.ne.s32.totalorder %s209, %s211
      %p218 = scmp.eq.s32.totalorder %s33, 1
      %p219 = por %p217, %p218
      %p220 = scmp.ne.s32.totalorder %s211, %s212
      %p221 = scmp.eq.s32.totalorder %s33, 0
      %p222 = por %p220, %p221
      %p223 = scmp.ne.s32.totalorder %s211, %s212
      %p224 = scmp.eq.s32.totalorder %s34, 1
      %p225 = por %p223, %p224
      %p227 = scmp.ne.s32.totalorder %s212, %s226
      %p228 = scmp.eq.s32.totalorder %s34, 0
      %p229 = por %p227, %p228
      %s231 = sadd.s32 %s230, 1
      %p234 = scmp.eq.s32.totalorder %s28, 1
      %p235 = scmp.ne.s32.totalorder %s230, %s232
      %p236 = scmp.eq.s32.totalorder %s28, 0
      %p237 = por %p235, %p236
      %p238 = scmp.ne.s32.totalorder %s230, %s232
      %p239 = scmp.eq.s32.totalorder %s33, 1
      %p240 = por %p238, %p239
      %p241 = scmp.ne.s32.totalorder %s232, %s233
      %p242 = scmp.eq.s32.totalorder %s33, 0
      %p243 = por %p241, %p242
      %p244 = scmp.ne.s32.totalorder %s232, %s233
      %p245 = scmp.eq.s32.totalorder %s34, 1
      %p246 = por %p244, %p245
      %p248 = scmp.ne.s32.totalorder %s233, %s247
      %p249 = scmp.eq.s32.totalorder %s34, 0
      %p250 = por %p248, %p249
      %s252 = sadd.s32 %s251, 1
      %p255 = scmp.eq.s32.totalorder %s28, 1
      %p256 = scmp.ne.s32.totalorder %s251, %s253
      %p257 = scmp.eq.s32.totalorder %s28, 0
      %p258 = por %p256, %p257
      %p259 = scmp.ne.s32.totalorder %s251, %s253
      %p260 = scmp.eq.s32.totalorder %s33, 1
      %p261 = por %p259, %p260
      %p262 = scmp.ne.s32.totalorder %s253, %s254
      %p263 = scmp.eq.s32.totalorder %s33, 0
      %p264 = por %p262, %p263
      %p265 = scmp.ne.s32.totalorder %s253, %s254
      %p266 = scmp.eq.s32.totalorder %s34, 1
      %p267 = por %p265, %p266
      %p269 = scmp.ne.s32.totalorder %s254, %s268
      %p270 = scmp.eq.s32.totalorder %s34, 0
      %p271 = por %p269, %p270
      %s273 = sadd.s32 %s272, 1
      %p276 = scmp.eq.s32.totalorder %s28, 1
      %p277 = scmp.ne.s32.totalorder %s272, %s274
      %p278 = scmp.eq.s32.totalorder %s28, 0
      %p279 = por %p277, %p278
      %p280 = scmp.ne.s32.totalorder %s272, %s274
      %p281 = scmp.eq.s32.totalorder %s33, 1
      %p282 = por %p280, %p281
      %p283 = scmp.ne.s32.totalorder %s274, %s275
      %p284 = scmp.eq.s32.totalorder %s33, 0
      %p285 = por %p283, %p284
      %p286 = scmp.ne.s32.totalorder %s274, %s275
      %p287 = scmp.eq.s32.totalorder %s34, 1
      %p288 = por %p286, %p287
      %p290 = scmp.ne.s32.totalorder %s275, %s289
      %p291 = scmp.eq.s32.totalorder %s34, 0
      %p292 = por %p290, %p291
      %s294 = sadd.s32 %s293, 1
      %p297 = scmp.eq.s32.totalorder %s28, 1
      %p298 = scmp.ne.s32.totalorder %s293, %s295
      %p299 = scmp.eq.s32.totalorder %s28, 0
      %p300 = por %p298, %p299
      %p301 = scmp.ne.s32.totalorder %s293, %s295
      %p302 = scmp.eq.s32.totalorder %s33, 1
      %p303 = por %p301, %p302
      %p304 = scmp.ne.s32.totalorder %s295, %s296
      %p305 = scmp.eq.s32.totalorder %s33, 0
      %p306 = por %p304, %p305
      %p307 = scmp.ne.s32.totalorder %s295, %s296
      %p308 = scmp.eq.s32.totalorder %s34, 1
      %p309 = por %p307, %p308
      %p311 = scmp.ne.s32.totalorder %s296, %s310
      %p312 = scmp.eq.s32.totalorder %s34, 0
      %p313 = por %p311, %p312
      %s314 = ssub.s32 %s28, %s35
      %p315 = scmp.eq.s32.totalorder %s314, 0
      %s317 = sadd.s32 %s316, 1
      %s318 = scalar_select %p315, %s316, %s317
      %p321 = pneg %p315
      %p322 = scmp.eq.s32.totalorder %s28, 1
      %p323 = por %p321, %p322
      %p324 = scmp.ne.s32.totalorder %s316, %s319
      %p325 = scmp.eq.s32.totalorder %s28, 0
      %p326 = por %p324, %p325
      %p327 = scmp.ne.s32.totalorder %s316, %s319
      %p328 = scmp.eq.s32.totalorder %s33, 1
      %p329 = por %p327, %p328
      %p330 = scmp.ne.s32.totalorder %s319, %s320
      %p331 = scmp.eq.s32.totalorder %s33, 0
      %p332 = por %p330, %p331
      %p333 = scmp.ne.s32.totalorder %s319, %s320
      %p334 = scmp.eq.s32.totalorder %s34, 1
      %p335 = por %p333, %p334
      %p337 = scmp.ne.s32.totalorder %s320, %s336
      %p338 = scmp.eq.s32.totalorder %s34, 0
      %p339 = por %p337, %p338
      %p340 = scmp.le.s32.totalorder 1, %s28
      %p341 = scmp.lt.s32.totalorder %s28, 3
      %p342 = pnand %p340, %p341
      %p343 = pneg %p342
      // Predicated region
      $region9: #{tpu_custom_call.1} parent=5 // pred_check
        _
      $region10: #{tpu_custom_call.1} parent=5 // pred_check_branch
        %345 = sbr.rel (%p342) target = $region12
      $region11: #{tpu_custom_call.1} parent=5 // pred_region
        %s346 = ssub.s32 %s28, 1
        // Predicated region
        $region13: #{tpu_custom_call.1} parent=11 // pred_check
          %p347 = pneg %p75
        $region14: #{tpu_custom_call.1} parent=11 // pred_check_branch
          %349 = sbr.rel (%p347) target = $region16
        $region15: #{tpu_custom_call.1} parent=11 // pred_region
          %351 = vsyncadd [#allocation6], 0
          %s352 = sshll.u32 %s1, 4
          %s353 = int_to_ptr.hbm [resolvable:$true] %s352
          %s354 = sshll.u32 [#allocation5], 4
          %s355 = int_to_ptr.vmem [resolvable:$true] %s354
          %360 = dma.hbm_to_vmem [thread:$0]  %s353, 2048, %s355, [#allocation6], 128, 128, 8
        $region16: #{tpu_custom_call.1} parent=11 // pred_fallthru
          _
        // Predicated region
        $region17: #{tpu_custom_call.1} parent=11 // pred_check
          %p361 = pneg %p96
        $region18: #{tpu_custom_call.1} parent=11 // pred_check_branch
          %363 = sbr.rel (%p361) target = $region20
        $region19: #{tpu_custom_call.1} parent=11 // pred_region
          _
        $region20: #{tpu_custom_call.1} parent=11 // pred_fallthru
          _
        // Predicated region
        $region21: #{tpu_custom_call.1} parent=11 // pred_check
          %p364 = pneg %p117
        $region22: #{tpu_custom_call.1} parent=11 // pred_check_branch
          %366 = sbr.rel (%p364) target = $region24
        $region23: #{tpu_custom_call.1} parent=11 // pred_region
          %368 = vsyncadd [#allocation6], 0
          %s369 = sshll.u32 %s3, 4
          %s370 = int_to_ptr.hbm [resolvable:$true] %s369
          %s371 = sshll.u32 [#allocation7], 4
          %s372 = int_to_ptr.vmem [resolvable:$true] %s371
          %377 = dma.hbm_to_vmem [thread:$0]  %s370, 2048, %s372, [#allocation6], 128, 128, 8
        $region24: #{tpu_custom_call.1} parent=11 // pred_fallthru
          _
        // Predicated region
        $region25: #{tpu_custom_call.1} parent=11 // pred_check
          %p378 = pneg %p138
        $region26: #{tpu_custom_call.1} parent=11 // pred_check_branch
          %380 = sbr.rel (%p378) target = $region28
        $region27: #{tpu_custom_call.1} parent=11 // pred_region
          _
        $region28: #{tpu_custom_call.1} parent=11 // pred_fallthru
          _
        // Predicated region
        $region29: #{tpu_custom_call.1} parent=11 // pred_check
          %p381 = pneg %p159
        $region30: #{tpu_custom_call.1} parent=11 // pred_check_branch
          %383 = sbr.rel (%p381) target = $region32
        $region31: #{tpu_custom_call.1} parent=11 // pred_region
          %385 = vsyncadd [#allocation9], 0
          %s386 = sshll.u32 %s5, 4
          %s387 = int_to_ptr.hbm [resolvable:$true] %s386
          %s388 = sshll.u32 [#allocation8], 4
          %s389 = int_to_ptr.vmem [resolvable:$true] %s388
          %394 = dma.hbm_to_vmem [thread:$0]  %s387, 2048, %s389, [#allocation9], 128, 128, 8
        $region32: #{tpu_custom_call.1} parent=11 // pred_fallthru
          _
        // Predicated region
        $region33: #{tpu_custom_call.1} parent=11 // pred_check
          %p395 = pneg %p180
        $region34: #{tpu_custom_call.1} parent=11 // pred_check_branch
          %397 = sbr.rel (%p395) target = $region36
        $region35: #{tpu_custom_call.1} parent=11 // pred_region
          _
        $region36: #{tpu_custom_call.1} parent=11 // pred_fallthru
          _
        // Predicated region
        $region37: #{tpu_custom_call.1} parent=11 // pred_check
          %p398 = pneg %p201
        $region38: #{tpu_custom_call.1} parent=11 // pred_check_branch
          %400 = sbr.rel (%p398) target = $region40
        $region39: #{tpu_custom_call.1} parent=11 // pred_region
          %402 = vsyncadd [#allocation9], 0
          %s403 = sshll.u32 %s7, 4
          %s404 = int_to_ptr.hbm [resolvable:$true] %s403
          %s405 = sshll.u32 [#allocation10], 4
          %s406 = int_to_ptr.vmem [resolvable:$true] %s405
          %411 = dma.hbm_to_vmem [thread:$0]  %s404, 2048, %s406, [#allocation9], 128, 128, 8
        $region40: #{tpu_custom_call.1} parent=11 // pred_fallthru
          _
        // Predicated region
        $region41: #{tpu_custom_call.1} parent=11 // pred_check
          %p412 = pneg %p222
        $region42: #{tpu_custom_call.1} parent=11 // pred_check_branch
          %414 = sbr.rel (%p412) target = $region44
        $region43: #{tpu_custom_call.1} parent=11 // pred_region
          _
        $region44: #{tpu_custom_call.1} parent=11 // pred_fallthru
          _
        // Predicated region
        $region45: #{tpu_custom_call.1} parent=11 // pred_check
          %p415 = pneg %p243
        $region46: #{tpu_custom_call.1} parent=11 // pred_check_branch
          %417 = sbr.rel (%p415) target = $region48
        $region47: #{tpu_custom_call.1} parent=11 // pred_region
          %419 = vsyncadd [#allocation12], 0
          %s420 = sshll.u32 %s9, 4
          %s421 = int_to_ptr.hbm [resolvable:$true] %s420
          %s422 = sshll.u32 [#allocation11], 4
          %s423 = int_to_ptr.vmem [resolvable:$true] %s422
          %428 = dma.hbm_to_vmem [thread:$0]  %s421, 2048, %s423, [#allocation12], 128, 128, 8
        $region48: #{tpu_custom_call.1} parent=11 // pred_fallthru
          _
        // Predicated region
        $region49: #{tpu_custom_call.1} parent=11 // pred_check
          %p429 = pneg %p264
        $region50: #{tpu_custom_call.1} parent=11 // pred_check_branch
          %431 = sbr.rel (%p429) target = $region52
        $region51: #{tpu_custom_call.1} parent=11 // pred_region
          _
        $region52: #{tpu_custom_call.1} parent=11 // pred_fallthru
          _
        // Predicated region
        $region53: #{tpu_custom_call.1} parent=11 // pred_check
          %p432 = pneg %p285
        $region54: #{tpu_custom_call.1} parent=11 // pred_check_branch
          %434 = sbr.rel (%p432) target = $region56
        $region55: #{tpu_custom_call.1} parent=11 // pred_region
          %436 = vsyncadd [#allocation12], 0
          %s437 = sshll.u32 %s11, 4
          %s438 = int_to_ptr.hbm [resolvable:$true] %s437
          %s439 = sshll.u32 [#allocation13], 4
          %s440 = int_to_ptr.vmem [resolvable:$true] %s439
          %445 = dma.hbm_to_vmem [thread:$0]  %s438, 2048, %s440, [#allocation12], 128, 128, 8
        $region56: #{tpu_custom_call.1} parent=11 // pred_fallthru
          _
        // Predicated region
        $region57: #{tpu_custom_call.1} parent=11 // pred_check
          %p446 = pneg %p306
        $region58: #{tpu_custom_call.1} parent=11 // pred_check_branch
          %448 = sbr.rel (%p446) target = $region60
        $region59: #{tpu_custom_call.1} parent=11 // pred_region
          _
        $region60: #{tpu_custom_call.1} parent=11 // pred_fallthru
          _
      $region12: #{tpu_custom_call.1} parent=5 // pred_fallthru
        _
      %p449 = scmp.lt.s32.totalorder %s28, 2
      // Predicated region
      $region61: #{tpu_custom_call.1} parent=5 // pred_check
        %p450 = pneg %p449
      $region62: #{tpu_custom_call.1} parent=5 // pred_check_branch
        %452 = sbr.rel (%p450) target = $region64
      $region63: #{tpu_custom_call.1} parent=5 // pred_region
        // Predicated region
        $region65: #{tpu_custom_call.1} parent=63 // pred_check
          %p453 = pneg %p48
        $region66: #{tpu_custom_call.1} parent=63 // pred_check_branch
          %455 = sbr.rel (%p453) target = $region68
        $region67: #{tpu_custom_call.1} parent=63 // pred_region
          %s456 = sand.u32 %s38, 1
          %s457 = scalar_lea.sflag [#allocation3], %s456
          %s458 = sand.u32 %s38, 1
          %s459 = smul.addr %s458, 128
          %s460 = scalar_lea.vmem [#allocation2], %s459
          %s461 = smul.u32 16, %s28
          %463 = vsyncadd %s457, 0
          %s464 = smul.addr %s461, 8
          %s465 = scalar_lea.hbm %s0, %s464
          %s466 = sshll.u32 %s465, 4
          %s467 = int_to_ptr.hbm [resolvable:$true] %s466
          %s468 = sshll.u32 %s460, 4
          %s469 = int_to_ptr.vmem [resolvable:$true] %s468
          %474 = dma.hbm_to_vmem [thread:$0]  %s467, 2048, %s469, %s457, 128, 128, 8
        $region68: #{tpu_custom_call.1} parent=63 // pred_fallthru
          _
      $region64: #{tpu_custom_call.1} parent=5 // pred_fallthru
        _
      %p475 = scmp.le.s32.totalorder 1, %s28
      %p476 = scmp.lt.s32.totalorder %s28, 3
      %p477 = pnand %p475, %p476
      %p478 = pneg %p477
      // Predicated region
      $region69: #{tpu_custom_call.1} parent=5 // pred_check
        _
      $region70: #{tpu_custom_call.1} parent=5 // pred_check_branch
        %480 = sbr.rel (%p477) target = $region72
      $region71: #{tpu_custom_call.1} parent=5 // pred_region
        %s481 = ssub.s32 %s28, 1
        %s482 = sand.u32 %s41, 1
        %s483 = scalar_lea.sflag [#allocation3], %s482
        %s484 = sand.u32 %s41, 1
        %s485 = smul.addr %s484, 128
        %s486 = scalar_lea.vmem [#allocation2], %s485
        // Predicated region
        $region73: #{tpu_custom_call.1} parent=71 // pred_check
          %p487 = pneg %p54
        $region74: #{tpu_custom_call.1} parent=71 // pred_check_branch
          %489 = sbr.rel (%p487) target = $region76
        $region75: #{tpu_custom_call.1} parent=71 // pred_region
          %491 = dma.done %s483, 2048
        $region76: #{tpu_custom_call.1} parent=71 // pred_fallthru
          _
        // Predicated region
        $region77: #{tpu_custom_call.1} parent=71 // pred_check
          %p492 = pneg %p75
        $region78: #{tpu_custom_call.1} parent=71 // pred_check_branch
          %494 = sbr.rel (%p492) target = $region80
        $region79: #{tpu_custom_call.1} parent=71 // pred_region
          %496 = dma.done [#allocation6], 2048
        $region80: #{tpu_custom_call.1} parent=71 // pred_fallthru
          _
        // Predicated region
        $region81: #{tpu_custom_call.1} parent=71 // pred_check
          %p497 = pneg %p117
        $region82: #{tpu_custom_call.1} parent=71 // pred_check_branch
          %499 = sbr.rel (%p497) target = $region84
        $region83: #{tpu_custom_call.1} parent=71 // pred_region
          %501 = dma.done [#allocation6], 2048
        $region84: #{tpu_custom_call.1} parent=71 // pred_fallthru
          _
        // Predicated region
        $region85: #{tpu_custom_call.1} parent=71 // pred_check
          %p502 = pneg %p159
        $region86: #{tpu_custom_call.1} parent=71 // pred_check_branch
          %504 = sbr.rel (%p502) target = $region88
        $region87: #{tpu_custom_call.1} parent=71 // pred_region
          %506 = dma.done [#allocation9], 2048
        $region88: #{tpu_custom_call.1} parent=71 // pred_fallthru
          _
        // Predicated region
        $region89: #{tpu_custom_call.1} parent=71 // pred_check
          %p507 = pneg %p201
        $region90: #{tpu_custom_call.1} parent=71 // pred_check_branch
          %509 = sbr.rel (%p507) target = $region92
        $region91: #{tpu_custom_call.1} parent=71 // pred_region
          %511 = dma.done [#allocation9], 2048
        $region92: #{tpu_custom_call.1} parent=71 // pred_fallthru
          _
        // Predicated region
        $region93: #{tpu_custom_call.1} parent=71 // pred_check
          %p512 = pneg %p243
        $region94: #{tpu_custom_call.1} parent=71 // pred_check_branch
          %514 = sbr.rel (%p512) target = $region96
        $region95: #{tpu_custom_call.1} parent=71 // pred_region
          %516 = dma.done [#allocation12], 2048
        $region96: #{tpu_custom_call.1} parent=71 // pred_fallthru
          _
        // Predicated region
        $region97: #{tpu_custom_call.1} parent=71 // pred_check
          %p517 = pneg %p285
        $region98: #{tpu_custom_call.1} parent=71 // pred_check_branch
          %519 = sbr.rel (%p517) target = $region100
        $region99: #{tpu_custom_call.1} parent=71 // pred_region
          %521 = dma.done [#allocation12], 2048
        $region100: #{tpu_custom_call.1} parent=71 // pred_fallthru
          _
        %s522 = sand.u32 %s41, 1
        %s523 = scalar_lea.sflag [#allocation3], %s522
        %s524 = sand.u32 %s41, 1
        %s525 = smul.addr %s524, 128
        %s526 = scalar_lea.vmem [#allocation2], %s525
        %p527 = pneg %p54
        %p528 = pneg %p51
        %p529 = pneg %p75
        %p530 = pneg %p72
        %p531 = pneg %p96
        %p532 = pneg %p93
        %p533 = pneg %p117
        %p534 = pneg %p114
        %p535 = pneg %p138
        %p536 = pneg %p135
        %p537 = pneg %p159
        %p538 = pneg %p156
        %p539 = pneg %p180
        %p540 = pneg %p177
        %p541 = pneg %p201
        %p542 = pneg %p198
        %p543 = pneg %p222
        %p544 = pneg %p219
        %p545 = pneg %p243
        %p546 = pneg %p240
        %p547 = pneg %p264
        %p548 = pneg %p261
        %p549 = pneg %p285
        %p550 = pneg %p282
        %p551 = pneg %p306
        %p552 = pneg %p303
        %p553 = pneg %p332
        %p554 = pneg %p329
        %s555 = sand.u32 %s319, 1
        %s556 = scalar_lea.sflag [#allocation4], %s555
        %s557 = sand.u32 %s319, 1
        %s558 = smul.addr %s557, 128
        %s559 = scalar_lea.vmem [#allocation14], %s558
        %s560 = smul.u32 16, %s33
        %s561 = smul.u32 16, %s33
        %v562 = vld [vmem:[%s486] sm:$0xff]
        %v563 = vld [vmem:[%s486 + $0x8] sm:$0xff]
        %v564 = vld [vmem:[%s486 + $0x10] sm:$0xff]
        %v565 = vld [vmem:[%s486 + $0x18] sm:$0xff]
        %v566 = vld [vmem:[%s486 + $0x20] sm:$0xff]
        %v567 = vld [vmem:[%s486 + $0x28] sm:$0xff]
        %v568 = vld [vmem:[%s486 + $0x30] sm:$0xff]
        %v569 = vld [vmem:[%s486 + $0x38] sm:$0xff]
        %v570 = vld [vmem:[%s486 + $0x40] sm:$0xff]
        %v571 = vld [vmem:[%s486 + $0x48] sm:$0xff]
        %v572 = vld [vmem:[%s486 + $0x50] sm:$0xff]
        %v573 = vld [vmem:[%s486 + $0x58] sm:$0xff]
        %v574 = vld [vmem:[%s486 + $0x60] sm:$0xff]
        %v575 = vld [vmem:[%s486 + $0x68] sm:$0xff]
        %v576 = vld [vmem:[%s486 + $0x70] sm:$0xff]
        %v577 = vld [vmem:[%s486 + $0x78] sm:$0xff]
        %v578 = vld [vmem:[#allocation5] sm:$0xff]
        %v579 = vld [vmem:[#allocation5 + $0x8] sm:$0xff]
        %v580 = vld [vmem:[#allocation5 + $0x10] sm:$0xff]
        %v581 = vld [vmem:[#allocation5 + $0x18] sm:$0xff]
        %v582 = vld [vmem:[#allocation5 + $0x20] sm:$0xff]
        %v583 = vld [vmem:[#allocation5 + $0x28] sm:$0xff]
        %v584 = vld [vmem:[#allocation5 + $0x30] sm:$0xff]
        %v585 = vld [vmem:[#allocation5 + $0x38] sm:$0xff]
        %v586 = vld [vmem:[#allocation5 + $0x40] sm:$0xff]
        %v587 = vld [vmem:[#allocation5 + $0x48] sm:$0xff]
        %v588 = vld [vmem:[#allocation5 + $0x50] sm:$0xff]
        %v589 = vld [vmem:[#allocation5 + $0x58] sm:$0xff]
        %v590 = vld [vmem:[#allocation5 + $0x60] sm:$0xff]
        %v591 = vld [vmem:[#allocation5 + $0x68] sm:$0xff]
        %v592 = vld [vmem:[#allocation5 + $0x70] sm:$0xff]
        %v593 = vld [vmem:[#allocation5 + $0x78] sm:$0xff]
        %v594 = vld [vmem:[%s2] sm:$0x1]
        %v596 = vperm.slane %v594, 0
        %598 = vmatpush.msra.mxu0 %v593
        %599 = vmatpush.msra.mxu0 %v592
        %600 = vmatpush.msra.mxu0 %v591
        %601 = vmatpush.msra.mxu0 %v590
        %602 = vmatpush.msra.mxu0 %v589
        %603 = vmatpush.msra.mxu0 %v588
        %604 = vmatpush.msra.mxu0 %v587
        %605 = vmatpush.msra.mxu0 %v586
        %606 = vmatpush.msra.mxu0 %v585
        %607 = vmatpush.msra.mxu0 %v584
        %608 = vmatpush.msra.mxu0 %v583
        %609 = vmatpush.msra.mxu0 %v582
        %610 = vmatpush.msra.mxu0 %v581
        %611 = vmatpush.msra.mxu0 %v580
        %612 = vmatpush.msra.mxu0 %v579
        %613 = vmatpush.msra.mxu0 %v578
        %614 = vmatmul.f32.gmra.mxu0 %v562
        %v615 = vpop.f32.mrf.mxu0
        %v616 = vadd.f32 %v596, %v615
        %617 = vmatmul.f32.gmra.mxu0 %v563
        %v618 = vpop.f32.mrf.mxu0
        %v619 = vadd.f32 %v596, %v618
        %620 = vmatmul.f32.gmra.mxu0 %v564
        %v621 = vpop.f32.mrf.mxu0
        %v622 = vadd.f32 %v596, %v621
        %623 = vmatmul.f32.gmra.mxu0 %v565
        %v624 = vpop.f32.mrf.mxu0
        %v625 = vadd.f32 %v596, %v624
        %626 = vmatmul.f32.gmra.mxu0 %v566
        %v627 = vpop.f32.mrf.mxu0
        %v628 = vadd.f32 %v596, %v627
        %629 = vmatmul.f32.gmra.mxu0 %v567
        %v630 = vpop.f32.mrf.mxu0
        %v631 = vadd.f32 %v596, %v630
        %632 = vmatmul.f32.gmra.mxu0 %v568
        %v633 = vpop.f32.mrf.mxu0
        %v634 = vadd.f32 %v596, %v633
        %635 = vmatmul.f32.gmra.mxu0 %v569
        %v636 = vpop.f32.mrf.mxu0
        %v637 = vadd.f32 %v596, %v636
        %638 = vmatmul.f32.gmra.mxu0 %v570
        %v639 = vpop.f32.mrf.mxu0
        %v640 = vadd.f32 %v596, %v639
        %641 = vmatmul.f32.gmra.mxu0 %v571
        %v642 = vpop.f32.mrf.mxu0
        %v643 = vadd.f32 %v596, %v642
        %644 = vmatmul.f32.gmra.mxu0 %v572
        %v645 = vpop.f32.mrf.mxu0
        %v646 = vadd.f32 %v596, %v645
        %647 = vmatmul.f32.gmra.mxu0 %v573
        %v648 = vpop.f32.mrf.mxu0
        %v649 = vadd.f32 %v596, %v648
        %650 = vmatmul.f32.gmra.mxu0 %v574
        %v651 = vpop.f32.mrf.mxu0
        %v652 = vadd.f32 %v596, %v651
        %653 = vmatmul.f32.gmra.mxu0 %v575
        %v654 = vpop.f32.mrf.mxu0
        %v655 = vadd.f32 %v596, %v654
        %656 = vmatmul.f32.gmra.mxu0 %v576
        %v657 = vpop.f32.mrf.mxu0
        %v658 = vadd.f32 %v596, %v657
        %659 = vmatmul.f32.gmra.mxu0 %v577
        %v660 = vpop.f32.mrf.mxu0
        %v661 = vadd.f32 %v596, %v660
        %662 = vdwg.mxu0
        %v663 = vxor.u32 %v616, 2147483648
        %v664 = vxor.u32 %v619, 2147483648
        %v665 = vxor.u32 %v622, 2147483648
        %v666 = vxor.u32 %v625, 2147483648
        %v667 = vxor.u32 %v628, 2147483648
        %v668 = vxor.u32 %v631, 2147483648
        %v669 = vxor.u32 %v634, 2147483648
        %v670 = vxor.u32 %v637, 2147483648
        %v671 = vxor.u32 %v640, 2147483648
        %v672 = vxor.u32 %v643, 2147483648
        %v673 = vxor.u32 %v646, 2147483648
        %v674 = vxor.u32 %v649, 2147483648
        %v675 = vxor.u32 %v652, 2147483648
        %v676 = vxor.u32 %v655, 2147483648
        %v677 = vxor.u32 %v658, 2147483648
        %v678 = vxor.u32 %v661, 2147483648
        %v679 = vmul.f32 %v663, 1.442695
        %v680 = vpow.pop %v679
        %v681 = vmul.f32 %v664, 1.442695
        %v682 = vpow.pop %v681
        %v683 = vmul.f32 %v665, 1.442695
        %v684 = vpow.pop %v683
        %v685 = vmul.f32 %v666, 1.442695
        %v686 = vpow.pop %v685
        %v687 = vmul.f32 %v667, 1.442695
        %v688 = vpow.pop %v687
        %v689 = vmul.f32 %v668, 1.442695
        %v690 = vpow.pop %v689
        %v691 = vmul.f32 %v669, 1.442695
        %v692 = vpow.pop %v691
        %v693 = vmul.f32 %v670, 1.442695
        %v694 = vpow.pop %v693
        %v695 = vmul.f32 %v671, 1.442695
        %v696 = vpow.pop %v695
        %v697 = vmul.f32 %v672, 1.442695
        %v698 = vpow.pop %v697
        %v699 = vmul.f32 %v673, 1.442695
        %v700 = vpow.pop %v699
        %v701 = vmul.f32 %v674, 1.442695
        %v702 = vpow.pop %v701
        %v703 = vmul.f32 %v675, 1.442695
        %v704 = vpow.pop %v703
        %v705 = vmul.f32 %v676, 1.442695
        %v706 = vpow.pop %v705
        %v707 = vmul.f32 %v677, 1.442695
        %v708 = vpow.pop %v707
        %v709 = vmul.f32 %v678, 1.442695
        %v710 = vpow.pop %v709
        %v711 = vadd.f32 %v680, 1.0
        %v712 = vadd.f32 %v682, 1.0
        %v713 = vadd.f32 %v684, 1.0
        %v714 = vadd.f32 %v686, 1.0
        %v715 = vadd.f32 %v688, 1.0
        %v716 = vadd.f32 %v690, 1.0
        %v717 = vadd.f32 %v692, 1.0
        %v718 = vadd.f32 %v694, 1.0
        %v719 = vadd.f32 %v696, 1.0
        %v720 = vadd.f32 %v698, 1.0
        %v721 = vadd.f32 %v700, 1.0
        %v722 = vadd.f32 %v702, 1.0
        %v723 = vadd.f32 %v704, 1.0
        %v724 = vadd.f32 %v706, 1.0
        %v725 = vadd.f32 %v708, 1.0
        %v726 = vadd.f32 %v710, 1.0
        %v727 = vrcp.pop %v711
        %v728 = vmul.f32 %v711, %v727
        %v729 = vsub.f32 1.0, %v728
        %v730 = vmul.f32 %v727, %v729
        %v731 = vadd.f32 %v727, %v730
        %vm732 = vweird.f32 %v711
        %vm733 = vweird.f32 %v727
        %vm734 = vmor %vm732, %vm733
        %v735 = vsel %vm734, %v727, %v731
        %v736 = vand.u32 2147483647, %v711
        %vm737 = vcmp.eq.f32.partialorder %v736, 8.507059e+37
        %v738 = vand.u32 %v711, 2147483648
        %v739 = vor.u32 1.1754944e-38, %v738
        %v740 = vsel %vm737, %v739, %v735
        %v741 = vmul.f32 1.0, %v740
        %v742 = vrcp.pop %v712
        %v743 = vmul.f32 %v712, %v742
        %v744 = vsub.f32 1.0, %v743
        %v745 = vmul.f32 %v742, %v744
        %v746 = vadd.f32 %v742, %v745
        %vm747 = vweird.f32 %v712
        %vm748 = vweird.f32 %v742
        %vm749 = vmor %vm747, %vm748
        %v750 = vsel %vm749, %v742, %v746
        %v751 = vand.u32 2147483647, %v712
        %vm752 = vcmp.eq.f32.partialorder %v751, 8.507059e+37
        %v753 = vand.u32 %v712, 2147483648
        %v754 = vor.u32 1.1754944e-38, %v753
        %v755 = vsel %vm752, %v754, %v750
        %v756 = vmul.f32 1.0, %v755
        %v757 = vrcp.pop %v713
        %v758 = vmul.f32 %v713, %v757
        %v759 = vsub.f32 1.0, %v758
        %v760 = vmul.f32 %v757, %v759
        %v761 = vadd.f32 %v757, %v760
        %vm762 = vweird.f32 %v713
        %vm763 = vweird.f32 %v757
        %vm764 = vmor %vm762, %vm763
        %v765 = vsel %vm764, %v757, %v761
        %v766 = vand.u32 2147483647, %v713
        %vm767 = vcmp.eq.f32.partialorder %v766, 8.507059e+37
        %v768 = vand.u32 %v713, 2147483648
        %v769 = vor.u32 1.1754944e-38, %v768
        %v770 = vsel %vm767, %v769, %v765
        %v771 = vmul.f32 1.0, %v770
        %v772 = vrcp.pop %v714
        %v773 = vmul.f32 %v714, %v772
        %v774 = vsub.f32 1.0, %v773
        %v775 = vmul.f32 %v772, %v774
        %v776 = vadd.f32 %v772, %v775
        %vm777 = vweird.f32 %v714
        %vm778 = vweird.f32 %v772
        %vm779 = vmor %vm777, %vm778
        %v780 = vsel %vm779, %v772, %v776
        %v781 = vand.u32 2147483647, %v714
        %vm782 = vcmp.eq.f32.partialorder %v781, 8.507059e+37
        %v783 = vand.u32 %v714, 2147483648
        %v784 = vor.u32 1.1754944e-38, %v783
        %v785 = vsel %vm782, %v784, %v780
        %v786 = vmul.f32 1.0, %v785
        %v787 = vrcp.pop %v715
        %v788 = vmul.f32 %v715, %v787
        %v789 = vsub.f32 1.0, %v788
        %v790 = vmul.f32 %v787, %v789
        %v791 = vadd.f32 %v787, %v790
        %vm792 = vweird.f32 %v715
        %vm793 = vweird.f32 %v787
        %vm794 = vmor %vm792, %vm793
        %v795 = vsel %vm794, %v787, %v791
        %v796 = vand.u32 2147483647, %v715
        %vm797 = vcmp.eq.f32.partialorder %v796, 8.507059e+37
        %v798 = vand.u32 %v715, 2147483648
        %v799 = vor.u32 1.1754944e-38, %v798
        %v800 = vsel %vm797, %v799, %v795
        %v801 = vmul.f32 1.0, %v800
        %v802 = vrcp.pop %v716
        %v803 = vmul.f32 %v716, %v802
        %v804 = vsub.f32 1.0, %v803
        %v805 = vmul.f32 %v802, %v804
        %v806 = vadd.f32 %v802, %v805
        %vm807 = vweird.f32 %v716
        %vm808 = vweird.f32 %v802
        %vm809 = vmor %vm807, %vm808
        %v810 = vsel %vm809, %v802, %v806
        %v811 = vand.u32 2147483647, %v716
        %vm812 = vcmp.eq.f32.partialorder %v811, 8.507059e+37
        %v813 = vand.u32 %v716, 2147483648
        %v814 = vor.u32 1.1754944e-38, %v813
        %v815 = vsel %vm812, %v814, %v810
        %v816 = vmul.f32 1.0, %v815
        %v817 = vrcp.pop %v717
        %v818 = vmul.f32 %v717, %v817
        %v819 = vsub.f32 1.0, %v818
        %v820 = vmul.f32 %v817, %v819
        %v821 = vadd.f32 %v817, %v820
        %vm822 = vweird.f32 %v717
        %vm823 = vweird.f32 %v817
        %vm824 = vmor %vm822, %vm823
        %v825 = vsel %vm824, %v817, %v821
        %v826 = vand.u32 2147483647, %v717
        %vm827 = vcmp.eq.f32.partialorder %v826, 8.507059e+37
        %v828 = vand.u32 %v717, 2147483648
        %v829 = vor.u32 1.1754944e-38, %v828
        %v830 = vsel %vm827, %v829, %v825
        %v831 = vmul.f32 1.0, %v830
        %v832 = vrcp.pop %v718
        %v833 = vmul.f32 %v718, %v832
        %v834 = vsub.f32 1.0, %v833
        %v835 = vmul.f32 %v832, %v834
        %v836 = vadd.f32 %v832, %v835
        %vm837 = vweird.f32 %v718
        %vm838 = vweird.f32 %v832
        %vm839 = vmor %vm837, %vm838
        %v840 = vsel %vm839, %v832, %v836
        %v841 = vand.u32 2147483647, %v718
        %vm842 = vcmp.eq.f32.partialorder %v841, 8.507059e+37
        %v843 = vand.u32 %v718, 2147483648
        %v844 = vor.u32 1.1754944e-38, %v843
        %v845 = vsel %vm842, %v844, %v840
        %v846 = vmul.f32 1.0, %v845
        %v847 = vrcp.pop %v719
        %v848 = vmul.f32 %v719, %v847
        %v849 = vsub.f32 1.0, %v848
        %v850 = vmul.f32 %v847, %v849
        %v851 = vadd.f32 %v847, %v850
        %vm852 = vweird.f32 %v719
        %vm853 = vweird.f32 %v847
        %vm854 = vmor %vm852, %vm853
        %v855 = vsel %vm854, %v847, %v851
        %v856 = vand.u32 2147483647, %v719
        %vm857 = vcmp.eq.f32.partialorder %v856, 8.507059e+37
        %v858 = vand.u32 %v719, 2147483648
        %v859 = vor.u32 1.1754944e-38, %v858
        %v860 = vsel %vm857, %v859, %v855
        %v861 = vmul.f32 1.0, %v860
        %v862 = vrcp.pop %v720
        %v863 = vmul.f32 %v720, %v862
        %v864 = vsub.f32 1.0, %v863
        %v865 = vmul.f32 %v862, %v864
        %v866 = vadd.f32 %v862, %v865
        %vm867 = vweird.f32 %v720
        %vm868 = vweird.f32 %v862
        %vm869 = vmor %vm867, %vm868
        %v870 = vsel %vm869, %v862, %v866
        %v871 = vand.u32 2147483647, %v720
        %vm872 = vcmp.eq.f32.partialorder %v871, 8.507059e+37
        %v873 = vand.u32 %v720, 2147483648
        %v874 = vor.u32 1.1754944e-38, %v873
        %v875 = vsel %vm872, %v874, %v870
        %v876 = vmul.f32 1.0, %v875
        %v877 = vrcp.pop %v721
        %v878 = vmul.f32 %v721, %v877
        %v879 = vsub.f32 1.0, %v878
        %v880 = vmul.f32 %v877, %v879
        %v881 = vadd.f32 %v877, %v880
        %vm882 = vweird.f32 %v721
        %vm883 = vweird.f32 %v877
        %vm884 = vmor %vm882, %vm883
        %v885 = vsel %vm884, %v877, %v881
        %v886 = vand.u32 2147483647, %v721
        %vm887 = vcmp.eq.f32.partialorder %v886, 8.507059e+37
        %v888 = vand.u32 %v721, 2147483648
        %v889 = vor.u32 1.1754944e-38, %v888
        %v890 = vsel %vm887, %v889, %v885
        %v891 = vmul.f32 1.0, %v890
        %v892 = vrcp.pop %v722
        %v893 = vmul.f32 %v722, %v892
        %v894 = vsub.f32 1.0, %v893
        %v895 = vmul.f32 %v892, %v894
        %v896 = vadd.f32 %v892, %v895
        %vm897 = vweird.f32 %v722
        %vm898 = vweird.f32 %v892
        %vm899 = vmor %vm897, %vm898
        %v900 = vsel %vm899, %v892, %v896
        %v901 = vand.u32 2147483647, %v722
        %vm902 = vcmp.eq.f32.partialorder %v901, 8.507059e+37
        %v903 = vand.u32 %v722, 2147483648
        %v904 = vor.u32 1.1754944e-38, %v903
        %v905 = vsel %vm902, %v904, %v900
        %v906 = vmul.f32 1.0, %v905
        %v907 = vrcp.pop %v723
        %v908 = vmul.f32 %v723, %v907
        %v909 = vsub.f32 1.0, %v908
        %v910 = vmul.f32 %v907, %v909
        %v911 = vadd.f32 %v907, %v910
        %vm912 = vweird.f32 %v723
        %vm913 = vweird.f32 %v907
        %vm914 = vmor %vm912, %vm913
        %v915 = vsel %vm914, %v907, %v911
        %v916 = vand.u32 2147483647, %v723
        %vm917 = vcmp.eq.f32.partialorder %v916, 8.507059e+37
        %v918 = vand.u32 %v723, 2147483648
        %v919 = vor.u32 1.1754944e-38, %v918
        %v920 = vsel %vm917, %v919, %v915
        %v921 = vmul.f32 1.0, %v920
        %v922 = vrcp.pop %v724
        %v923 = vmul.f32 %v724, %v922
        %v924 = vsub.f32 1.0, %v923
        %v925 = vmul.f32 %v922, %v924
        %v926 = vadd.f32 %v922, %v925
        %vm927 = vweird.f32 %v724
        %vm928 = vweird.f32 %v922
        %vm929 = vmor %vm927, %vm928
        %v930 = vsel %vm929, %v922, %v926
        %v931 = vand.u32 2147483647, %v724
        %vm932 = vcmp.eq.f32.partialorder %v931, 8.507059e+37
        %v933 = vand.u32 %v724, 2147483648
        %v934 = vor.u32 1.1754944e-38, %v933
        %v935 = vsel %vm932, %v934, %v930
        %v936 = vmul.f32 1.0, %v935
        %v937 = vrcp.pop %v725
        %v938 = vmul.f32 %v725, %v937
        %v939 = vsub.f32 1.0, %v938
        %v940 = vmul.f32 %v937, %v939
        %v941 = vadd.f32 %v937, %v940
        %vm942 = vweird.f32 %v725
        %vm943 = vweird.f32 %v937
        %vm944 = vmor %vm942, %vm943
        %v945 = vsel %vm944, %v937, %v941
        %v946 = vand.u32 2147483647, %v725
        %vm947 = vcmp.eq.f32.partialorder %v946, 8.507059e+37
        %v948 = vand.u32 %v725, 2147483648
        %v949 = vor.u32 1.1754944e-38, %v948
        %v950 = vsel %vm947, %v949, %v945
        %v951 = vmul.f32 1.0, %v950
        %v952 = vrcp.pop %v726
        %v953 = vmul.f32 %v726, %v952
        %v954 = vsub.f32 1.0, %v953
        %v955 = vmul.f32 %v952, %v954
        %v956 = vadd.f32 %v952, %v955
        %vm957 = vweird.f32 %v726
        %vm958 = vweird.f32 %v952
        %vm959 = vmor %vm957, %vm958
        %v960 = vsel %vm959, %v952, %v956
        %v961 = vand.u32 2147483647, %v726
        %vm962 = vcmp.eq.f32.partialorder %v961, 8.507059e+37
        %v963 = vand.u32 %v726, 2147483648
        %v964 = vor.u32 1.1754944e-38, %v963
        %v965 = vsel %vm962, %v964, %v960
        %v966 = vmul.f32 1.0, %v965
        %v967 = vld [vmem:[#allocation7] sm:$0xff]
        %v968 = vld [vmem:[#allocation7 + $0x8] sm:$0xff]
        %v969 = vld [vmem:[#allocation7 + $0x10] sm:$0xff]
        %v970 = vld [vmem:[#allocation7 + $0x18] sm:$0xff]
        %v971 = vld [vmem:[#allocation7 + $0x20] sm:$0xff]
        %v972 = vld [vmem:[#allocation7 + $0x28] sm:$0xff]
        %v973 = vld [vmem:[#allocation7 + $0x30] sm:$0xff]
        %v974 = vld [vmem:[#allocation7 + $0x38] sm:$0xff]
        %v975 = vld [vmem:[#allocation7 + $0x40] sm:$0xff]
        %v976 = vld [vmem:[#allocation7 + $0x48] sm:$0xff]
        %v977 = vld [vmem:[#allocation7 + $0x50] sm:$0xff]
        %v978 = vld [vmem:[#allocation7 + $0x58] sm:$0xff]
        %v979 = vld [vmem:[#allocation7 + $0x60] sm:$0xff]
        %v980 = vld [vmem:[#allocation7 + $0x68] sm:$0xff]
        %v981 = vld [vmem:[#allocation7 + $0x70] sm:$0xff]
        %v982 = vld [vmem:[#allocation7 + $0x78] sm:$0xff]
        %v983 = vld [vmem:[%s4] sm:$0x1]
        %v985 = vperm.slane %v983, 0
        %987 = vmatpush.msra.mxu0 %v982
        %988 = vmatpush.msra.mxu0 %v981
        %989 = vmatpush.msra.mxu0 %v980
        %990 = vmatpush.msra.mxu0 %v979
        %991 = vmatpush.msra.mxu0 %v978
        %992 = vmatpush.msra.mxu0 %v977
        %993 = vmatpush.msra.mxu0 %v976
        %994 = vmatpush.msra.mxu0 %v975
        %995 = vmatpush.msra.mxu0 %v974
        %996 = vmatpush.msra.mxu0 %v973
        %997 = vmatpush.msra.mxu0 %v972
        %998 = vmatpush.msra.mxu0 %v971
        %999 = vmatpush.msra.mxu0 %v970
        %1000 = vmatpush.msra.mxu0 %v969
        %1001 = vmatpush.msra.mxu0 %v968
        %1002 = vmatpush.msra.mxu0 %v967
        %1003 = vmatmul.f32.gmra.mxu0 %v741
        %v1004 = vpop.f32.mrf.mxu0
        %v1005 = vadd.f32 %v985, %v1004
        %1006 = vmatmul.f32.gmra.mxu0 %v756
        %v1007 = vpop.f32.mrf.mxu0
        %v1008 = vadd.f32 %v985, %v1007
        %1009 = vmatmul.f32.gmra.mxu0 %v771
        %v1010 = vpop.f32.mrf.mxu0
        %v1011 = vadd.f32 %v985, %v1010
        %1012 = vmatmul.f32.gmra.mxu0 %v786
        %v1013 = vpop.f32.mrf.mxu0
        %v1014 = vadd.f32 %v985, %v1013
        %1015 = vmatmul.f32.gmra.mxu0 %v801
        %v1016 = vpop.f32.mrf.mxu0
        %v1017 = vadd.f32 %v985, %v1016
        %1018 = vmatmul.f32.gmra.mxu0 %v816
        %v1019 = vpop.f32.mrf.mxu0
        %v1020 = vadd.f32 %v985, %v1019
        %1021 = vmatmul.f32.gmra.mxu0 %v831
        %v1022 = vpop.f32.mrf.mxu0
        %v1023 = vadd.f32 %v985, %v1022
        %1024 = vmatmul.f32.gmra.mxu0 %v846
        %v1025 = vpop.f32.mrf.mxu0
        %v1026 = vadd.f32 %v985, %v1025
        %1027 = vmatmul.f32.gmra.mxu0 %v861
        %v1028 = vpop.f32.mrf.mxu0
        %v1029 = vadd.f32 %v985, %v1028
        %1030 = vmatmul.f32.gmra.mxu0 %v876
        %v1031 = vpop.f32.mrf.mxu0
        %v1032 = vadd.f32 %v985, %v1031
        %1033 = vmatmul.f32.gmra.mxu0 %v891
        %v1034 = vpop.f32.mrf.mxu0
        %v1035 = vadd.f32 %v985, %v1034
        %1036 = vmatmul.f32.gmra.mxu0 %v906
        %v1037 = vpop.f32.mrf.mxu0
        %v1038 = vadd.f32 %v985, %v1037
        %1039 = vmatmul.f32.gmra.mxu0 %v921
        %v1040 = vpop.f32.mrf.mxu0
        %v1041 = vadd.f32 %v985, %v1040
        %1042 = vmatmul.f32.gmra.mxu0 %v936
        %v1043 = vpop.f32.mrf.mxu0
        %v1044 = vadd.f32 %v985, %v1043
        %1045 = vmatmul.f32.gmra.mxu0 %v951
        %v1046 = vpop.f32.mrf.mxu0
        %v1047 = vadd.f32 %v985, %v1046
        %1048 = vmatmul.f32.gmra.mxu0 %v966
        %v1049 = vpop.f32.mrf.mxu0
        %v1050 = vadd.f32 %v985, %v1049
        %1051 = vdwg.mxu0
        %v1052 = vxor.u32 %v1005, 2147483648
        %v1053 = vxor.u32 %v1008, 2147483648
        %v1054 = vxor.u32 %v1011, 2147483648
        %v1055 = vxor.u32 %v1014, 2147483648
        %v1056 = vxor.u32 %v1017, 2147483648
        %v1057 = vxor.u32 %v1020, 2147483648
        %v1058 = vxor.u32 %v1023, 2147483648
        %v1059 = vxor.u32 %v1026, 2147483648
        %v1060 = vxor.u32 %v1029, 2147483648
        %v1061 = vxor.u32 %v1032, 2147483648
        %v1062 = vxor.u32 %v1035, 2147483648
        %v1063 = vxor.u32 %v1038, 2147483648
        %v1064 = vxor.u32 %v1041, 2147483648
        %v1065 = vxor.u32 %v1044, 2147483648
        %v1066 = vxor.u32 %v1047, 2147483648
        %v1067 = vxor.u32 %v1050, 2147483648
        %v1068 = vmul.f32 %v1052, 1.442695
        %v1069 = vpow.pop %v1068
        %v1070 = vmul.f32 %v1053, 1.442695
        %v1071 = vpow.pop %v1070
        %v1072 = vmul.f32 %v1054, 1.442695
        %v1073 = vpow.pop %v1072
        %v1074 = vmul.f32 %v1055, 1.442695
        %v1075 = vpow.pop %v1074
        %v1076 = vmul.f32 %v1056, 1.442695
        %v1077 = vpow.pop %v1076
        %v1078 = vmul.f32 %v1057, 1.442695
        %v1079 = vpow.pop %v1078
        %v1080 = vmul.f32 %v1058, 1.442695
        %v1081 = vpow.pop %v1080
        %v1082 = vmul.f32 %v1059, 1.442695
        %v1083 = vpow.pop %v1082
        %v1084 = vmul.f32 %v1060, 1.442695
        %v1085 = vpow.pop %v1084
        %v1086 = vmul.f32 %v1061, 1.442695
        %v1087 = vpow.pop %v1086
        %v1088 = vmul.f32 %v1062, 1.442695
        %v1089 = vpow.pop %v1088
        %v1090 = vmul.f32 %v1063, 1.442695
        %v1091 = vpow.pop %v1090
        %v1092 = vmul.f32 %v1064, 1.442695
        %v1093 = vpow.pop %v1092
        %v1094 = vmul.f32 %v1065, 1.442695
        %v1095 = vpow.pop %v1094
        %v1096 = vmul.f32 %v1066, 1.442695
        %v1097 = vpow.pop %v1096
        %v1098 = vmul.f32 %v1067, 1.442695
        %v1099 = vpow.pop %v1098
        %v1100 = vadd.f32 %v1069, 1.0
        %v1101 = vadd.f32 %v1071, 1.0
        %v1102 = vadd.f32 %v1073, 1.0
        %v1103 = vadd.f32 %v1075, 1.0
        %v1104 = vadd.f32 %v1077, 1.0
        %v1105 = vadd.f32 %v1079, 1.0
        %v1106 = vadd.f32 %v1081, 1.0
        %v1107 = vadd.f32 %v1083, 1.0
        %v1108 = vadd.f32 %v1085, 1.0
        %v1109 = vadd.f32 %v1087, 1.0
        %v1110 = vadd.f32 %v1089, 1.0
        %v1111 = vadd.f32 %v1091, 1.0
        %v1112 = vadd.f32 %v1093, 1.0
        %v1113 = vadd.f32 %v1095, 1.0
        %v1114 = vadd.f32 %v1097, 1.0
        %v1115 = vadd.f32 %v1099, 1.0
        %v1116 = vrcp.pop %v1100
        %v1117 = vmul.f32 %v1100, %v1116
        %v1118 = vsub.f32 1.0, %v1117
        %v1119 = vmul.f32 %v1116, %v1118
        %v1120 = vadd.f32 %v1116, %v1119
        %vm1121 = vweird.f32 %v1100
        %vm1122 = vweird.f32 %v1116
        %vm1123 = vmor %vm1121, %vm1122
        %v1124 = vsel %vm1123, %v1116, %v1120
        %v1125 = vand.u32 2147483647, %v1100
        %vm1126 = vcmp.eq.f32.partialorder %v1125, 8.507059e+37
        %v1127 = vand.u32 %v1100, 2147483648
        %v1128 = vor.u32 1.1754944e-38, %v1127
        %v1129 = vsel %vm1126, %v1128, %v1124
        %v1130 = vmul.f32 1.0, %v1129
        %v1131 = vrcp.pop %v1101
        %v1132 = vmul.f32 %v1101, %v1131
        %v1133 = vsub.f32 1.0, %v1132
        %v1134 = vmul.f32 %v1131, %v1133
        %v1135 = vadd.f32 %v1131, %v1134
        %vm1136 = vweird.f32 %v1101
        %vm1137 = vweird.f32 %v1131
        %vm1138 = vmor %vm1136, %vm1137
        %v1139 = vsel %vm1138, %v1131, %v1135
        %v1140 = vand.u32 2147483647, %v1101
        %vm1141 = vcmp.eq.f32.partialorder %v1140, 8.507059e+37
        %v1142 = vand.u32 %v1101, 2147483648
        %v1143 = vor.u32 1.1754944e-38, %v1142
        %v1144 = vsel %vm1141, %v1143, %v1139
        %v1145 = vmul.f32 1.0, %v1144
        %v1146 = vrcp.pop %v1102
        %v1147 = vmul.f32 %v1102, %v1146
        %v1148 = vsub.f32 1.0, %v1147
        %v1149 = vmul.f32 %v1146, %v1148
        %v1150 = vadd.f32 %v1146, %v1149
        %vm1151 = vweird.f32 %v1102
        %vm1152 = vweird.f32 %v1146
        %vm1153 = vmor %vm1151, %vm1152
        %v1154 = vsel %vm1153, %v1146, %v1150
        %v1155 = vand.u32 2147483647, %v1102
        %vm1156 = vcmp.eq.f32.partialorder %v1155, 8.507059e+37
        %v1157 = vand.u32 %v1102, 2147483648
        %v1158 = vor.u32 1.1754944e-38, %v1157
        %v1159 = vsel %vm1156, %v1158, %v1154
        %v1160 = vmul.f32 1.0, %v1159
        %v1161 = vrcp.pop %v1103
        %v1162 = vmul.f32 %v1103, %v1161
        %v1163 = vsub.f32 1.0, %v1162
        %v1164 = vmul.f32 %v1161, %v1163
        %v1165 = vadd.f32 %v1161, %v1164
        %vm1166 = vweird.f32 %v1103
        %vm1167 = vweird.f32 %v1161
        %vm1168 = vmor %vm1166, %vm1167
        %v1169 = vsel %vm1168, %v1161, %v1165
        %v1170 = vand.u32 2147483647, %v1103
        %vm1171 = vcmp.eq.f32.partialorder %v1170, 8.507059e+37
        %v1172 = vand.u32 %v1103, 2147483648
        %v1173 = vor.u32 1.1754944e-38, %v1172
        %v1174 = vsel %vm1171, %v1173, %v1169
        %v1175 = vmul.f32 1.0, %v1174
        %v1176 = vrcp.pop %v1104
        %v1177 = vmul.f32 %v1104, %v1176
        %v1178 = vsub.f32 1.0, %v1177
        %v1179 = vmul.f32 %v1176, %v1178
        %v1180 = vadd.f32 %v1176, %v1179
        %vm1181 = vweird.f32 %v1104
        %vm1182 = vweird.f32 %v1176
        %vm1183 = vmor %vm1181, %vm1182
        %v1184 = vsel %vm1183, %v1176, %v1180
        %v1185 = vand.u32 2147483647, %v1104
        %vm1186 = vcmp.eq.f32.partialorder %v1185, 8.507059e+37
        %v1187 = vand.u32 %v1104, 2147483648
        %v1188 = vor.u32 1.1754944e-38, %v1187
        %v1189 = vsel %vm1186, %v1188, %v1184
        %v1190 = vmul.f32 1.0, %v1189
        %v1191 = vrcp.pop %v1105
        %v1192 = vmul.f32 %v1105, %v1191
        %v1193 = vsub.f32 1.0, %v1192
        %v1194 = vmul.f32 %v1191, %v1193
        %v1195 = vadd.f32 %v1191, %v1194
        %vm1196 = vweird.f32 %v1105
        %vm1197 = vweird.f32 %v1191
        %vm1198 = vmor %vm1196, %vm1197
        %v1199 = vsel %vm1198, %v1191, %v1195
        %v1200 = vand.u32 2147483647, %v1105
        %vm1201 = vcmp.eq.f32.partialorder %v1200, 8.507059e+37
        %v1202 = vand.u32 %v1105, 2147483648
        %v1203 = vor.u32 1.1754944e-38, %v1202
        %v1204 = vsel %vm1201, %v1203, %v1199
        %v1205 = vmul.f32 1.0, %v1204
        %v1206 = vrcp.pop %v1106
        %v1207 = vmul.f32 %v1106, %v1206
        %v1208 = vsub.f32 1.0, %v1207
        %v1209 = vmul.f32 %v1206, %v1208
        %v1210 = vadd.f32 %v1206, %v1209
        %vm1211 = vweird.f32 %v1106
        %vm1212 = vweird.f32 %v1206
        %vm1213 = vmor %vm1211, %vm1212
        %v1214 = vsel %vm1213, %v1206, %v1210
        %v1215 = vand.u32 2147483647, %v1106
        %vm1216 = vcmp.eq.f32.partialorder %v1215, 8.507059e+37
        %v1217 = vand.u32 %v1106, 2147483648
        %v1218 = vor.u32 1.1754944e-38, %v1217
        %v1219 = vsel %vm1216, %v1218, %v1214
        %v1220 = vmul.f32 1.0, %v1219
        %v1221 = vrcp.pop %v1107
        %v1222 = vmul.f32 %v1107, %v1221
        %v1223 = vsub.f32 1.0, %v1222
        %v1224 = vmul.f32 %v1221, %v1223
        %v1225 = vadd.f32 %v1221, %v1224
        %vm1226 = vweird.f32 %v1107
        %vm1227 = vweird.f32 %v1221
        %vm1228 = vmor %vm1226, %vm1227
        %v1229 = vsel %vm1228, %v1221, %v1225
        %v1230 = vand.u32 2147483647, %v1107
        %vm1231 = vcmp.eq.f32.partialorder %v1230, 8.507059e+37
        %v1232 = vand.u32 %v1107, 2147483648
        %v1233 = vor.u32 1.1754944e-38, %v1232
        %v1234 = vsel %vm1231, %v1233, %v1229
        %v1235 = vmul.f32 1.0, %v1234
        %v1236 = vrcp.pop %v1108
        %v1237 = vmul.f32 %v1108, %v1236
        %v1238 = vsub.f32 1.0, %v1237
        %v1239 = vmul.f32 %v1236, %v1238
        %v1240 = vadd.f32 %v1236, %v1239
        %vm1241 = vweird.f32 %v1108
        %vm1242 = vweird.f32 %v1236
        %vm1243 = vmor %vm1241, %vm1242
        %v1244 = vsel %vm1243, %v1236, %v1240
        %v1245 = vand.u32 2147483647, %v1108
        %vm1246 = vcmp.eq.f32.partialorder %v1245, 8.507059e+37
        %v1247 = vand.u32 %v1108, 2147483648
        %v1248 = vor.u32 1.1754944e-38, %v1247
        %v1249 = vsel %vm1246, %v1248, %v1244
        %v1250 = vmul.f32 1.0, %v1249
        %v1251 = vrcp.pop %v1109
        %v1252 = vmul.f32 %v1109, %v1251
        %v1253 = vsub.f32 1.0, %v1252
        %v1254 = vmul.f32 %v1251, %v1253
        %v1255 = vadd.f32 %v1251, %v1254
        %vm1256 = vweird.f32 %v1109
        %vm1257 = vweird.f32 %v1251
        %vm1258 = vmor %vm1256, %vm1257
        %v1259 = vsel %vm1258, %v1251, %v1255
        %v1260 = vand.u32 2147483647, %v1109
        %vm1261 = vcmp.eq.f32.partialorder %v1260, 8.507059e+37
        %v1262 = vand.u32 %v1109, 2147483648
        %v1263 = vor.u32 1.1754944e-38, %v1262
        %v1264 = vsel %vm1261, %v1263, %v1259
        %v1265 = vmul.f32 1.0, %v1264
        %v1266 = vrcp.pop %v1110
        %v1267 = vmul.f32 %v1110, %v1266
        %v1268 = vsub.f32 1.0, %v1267
        %v1269 = vmul.f32 %v1266, %v1268
        %v1270 = vadd.f32 %v1266, %v1269
        %vm1271 = vweird.f32 %v1110
        %vm1272 = vweird.f32 %v1266
        %vm1273 = vmor %vm1271, %vm1272
        %v1274 = vsel %vm1273, %v1266, %v1270
        %v1275 = vand.u32 2147483647, %v1110
        %vm1276 = vcmp.eq.f32.partialorder %v1275, 8.507059e+37
        %v1277 = vand.u32 %v1110, 2147483648
        %v1278 = vor.u32 1.1754944e-38, %v1277
        %v1279 = vsel %vm1276, %v1278, %v1274
        %v1280 = vmul.f32 1.0, %v1279
        %v1281 = vrcp.pop %v1111
        %v1282 = vmul.f32 %v1111, %v1281
        %v1283 = vsub.f32 1.0, %v1282
        %v1284 = vmul.f32 %v1281, %v1283
        %v1285 = vadd.f32 %v1281, %v1284
        %vm1286 = vweird.f32 %v1111
        %vm1287 = vweird.f32 %v1281
        %vm1288 = vmor %vm1286, %vm1287
        %v1289 = vsel %vm1288, %v1281, %v1285
        %v1290 = vand.u32 2147483647, %v1111
        %vm1291 = vcmp.eq.f32.partialorder %v1290, 8.507059e+37
        %v1292 = vand.u32 %v1111, 2147483648
        %v1293 = vor.u32 1.1754944e-38, %v1292
        %v1294 = vsel %vm1291, %v1293, %v1289
        %v1295 = vmul.f32 1.0, %v1294
        %v1296 = vrcp.pop %v1112
        %v1297 = vmul.f32 %v1112, %v1296
        %v1298 = vsub.f32 1.0, %v1297
        %v1299 = vmul.f32 %v1296, %v1298
        %v1300 = vadd.f32 %v1296, %v1299
        %vm1301 = vweird.f32 %v1112
        %vm1302 = vweird.f32 %v1296
        %vm1303 = vmor %vm1301, %vm1302
        %v1304 = vsel %vm1303, %v1296, %v1300
        %v1305 = vand.u32 2147483647, %v1112
        %vm1306 = vcmp.eq.f32.partialorder %v1305, 8.507059e+37
        %v1307 = vand.u32 %v1112, 2147483648
        %v1308 = vor.u32 1.1754944e-38, %v1307
        %v1309 = vsel %vm1306, %v1308, %v1304
        %v1310 = vmul.f32 1.0, %v1309
        %v1311 = vrcp.pop %v1113
        %v1312 = vmul.f32 %v1113, %v1311
        %v1313 = vsub.f32 1.0, %v1312
        %v1314 = vmul.f32 %v1311, %v1313
        %v1315 = vadd.f32 %v1311, %v1314
        %vm1316 = vweird.f32 %v1113
        %vm1317 = vweird.f32 %v1311
        %vm1318 = vmor %vm1316, %vm1317
        %v1319 = vsel %vm1318, %v1311, %v1315
        %v1320 = vand.u32 2147483647, %v1113
        %vm1321 = vcmp.eq.f32.partialorder %v1320, 8.507059e+37
        %v1322 = vand.u32 %v1113, 2147483648
        %v1323 = vor.u32 1.1754944e-38, %v1322
        %v1324 = vsel %vm1321, %v1323, %v1319
        %v1325 = vmul.f32 1.0, %v1324
        %v1326 = vrcp.pop %v1114
        %v1327 = vmul.f32 %v1114, %v1326
        %v1328 = vsub.f32 1.0, %v1327
        %v1329 = vmul.f32 %v1326, %v1328
        %v1330 = vadd.f32 %v1326, %v1329
        %vm1331 = vweird.f32 %v1114
        %vm1332 = vweird.f32 %v1326
        %vm1333 = vmor %vm1331, %vm1332
        %v1334 = vsel %vm1333, %v1326, %v1330
        %v1335 = vand.u32 2147483647, %v1114
        %vm1336 = vcmp.eq.f32.partialorder %v1335, 8.507059e+37
        %v1337 = vand.u32 %v1114, 2147483648
        %v1338 = vor.u32 1.1754944e-38, %v1337
        %v1339 = vsel %vm1336, %v1338, %v1334
        %v1340 = vmul.f32 1.0, %v1339
        %v1341 = vrcp.pop %v1115
        %v1342 = vmul.f32 %v1115, %v1341
        %v1343 = vsub.f32 1.0, %v1342
        %v1344 = vmul.f32 %v1341, %v1343
        %v1345 = vadd.f32 %v1341, %v1344
        %vm1346 = vweird.f32 %v1115
        %vm1347 = vweird.f32 %v1341
        %vm1348 = vmor %vm1346, %vm1347
        %v1349 = vsel %vm1348, %v1341, %v1345
        %v1350 = vand.u32 2147483647, %v1115
        %vm1351 = vcmp.eq.f32.partialorder %v1350, 8.507059e+37
        %v1352 = vand.u32 %v1115, 2147483648
        %v1353 = vor.u32 1.1754944e-38, %v1352
        %v1354 = vsel %vm1351, %v1353, %v1349
        %v1355 = vmul.f32 1.0, %v1354
        %v1356 = vld [vmem:[#allocation8] sm:$0xff]
        %v1357 = vld [vmem:[#allocation8 + $0x8] sm:$0xff]
        %v1358 = vld [vmem:[#allocation8 + $0x10] sm:$0xff]
        %v1359 = vld [vmem:[#allocation8 + $0x18] sm:$0xff]
        %v1360 = vld [vmem:[#allocation8 + $0x20] sm:$0xff]
        %v1361 = vld [vmem:[#allocation8 + $0x28] sm:$0xff]
        %v1362 = vld [vmem:[#allocation8 + $0x30] sm:$0xff]
        %v1363 = vld [vmem:[#allocation8 + $0x38] sm:$0xff]
        %v1364 = vld [vmem:[#allocation8 + $0x40] sm:$0xff]
        %v1365 = vld [vmem:[#allocation8 + $0x48] sm:$0xff]
        %v1366 = vld [vmem:[#allocation8 + $0x50] sm:$0xff]
        %v1367 = vld [vmem:[#allocation8 + $0x58] sm:$0xff]
        %v1368 = vld [vmem:[#allocation8 + $0x60] sm:$0xff]
        %v1369 = vld [vmem:[#allocation8 + $0x68] sm:$0xff]
        %v1370 = vld [vmem:[#allocation8 + $0x70] sm:$0xff]
        %v1371 = vld [vmem:[#allocation8 + $0x78] sm:$0xff]
        %v1372 = vld [vmem:[%s6] sm:$0x1]
        %v1374 = vperm.slane %v1372, 0
        %1376 = vmatpush.msra.mxu0 %v1371
        %1377 = vmatpush.msra.mxu0 %v1370
        %1378 = vmatpush.msra.mxu0 %v1369
        %1379 = vmatpush.msra.mxu0 %v1368
        %1380 = vmatpush.msra.mxu0 %v1367
        %1381 = vmatpush.msra.mxu0 %v1366
        %1382 = vmatpush.msra.mxu0 %v1365
        %1383 = vmatpush.msra.mxu0 %v1364
        %1384 = vmatpush.msra.mxu0 %v1363
        %1385 = vmatpush.msra.mxu0 %v1362
        %1386 = vmatpush.msra.mxu0 %v1361
        %1387 = vmatpush.msra.mxu0 %v1360
        %1388 = vmatpush.msra.mxu0 %v1359
        %1389 = vmatpush.msra.mxu0 %v1358
        %1390 = vmatpush.msra.mxu0 %v1357
        %1391 = vmatpush.msra.mxu0 %v1356
        %1392 = vmatmul.f32.gmra.mxu0 %v1130
        %v1393 = vpop.f32.mrf.mxu0
        %v1394 = vadd.f32 %v1374, %v1393
        %1395 = vmatmul.f32.gmra.mxu0 %v1145
        %v1396 = vpop.f32.mrf.mxu0
        %v1397 = vadd.f32 %v1374, %v1396
        %1398 = vmatmul.f32.gmra.mxu0 %v1160
        %v1399 = vpop.f32.mrf.mxu0
        %v1400 = vadd.f32 %v1374, %v1399
        %1401 = vmatmul.f32.gmra.mxu0 %v1175
        %v1402 = vpop.f32.mrf.mxu0
        %v1403 = vadd.f32 %v1374, %v1402
        %1404 = vmatmul.f32.gmra.mxu0 %v1190
        %v1405 = vpop.f32.mrf.mxu0
        %v1406 = vadd.f32 %v1374, %v1405
        %1407 = vmatmul.f32.gmra.mxu0 %v1205
        %v1408 = vpop.f32.mrf.mxu0
        %v1409 = vadd.f32 %v1374, %v1408
        %1410 = vmatmul.f32.gmra.mxu0 %v1220
        %v1411 = vpop.f32.mrf.mxu0
        %v1412 = vadd.f32 %v1374, %v1411
        %1413 = vmatmul.f32.gmra.mxu0 %v1235
        %v1414 = vpop.f32.mrf.mxu0
        %v1415 = vadd.f32 %v1374, %v1414
        %1416 = vmatmul.f32.gmra.mxu0 %v1250
        %v1417 = vpop.f32.mrf.mxu0
        %v1418 = vadd.f32 %v1374, %v1417
        %1419 = vmatmul.f32.gmra.mxu0 %v1265
        %v1420 = vpop.f32.mrf.mxu0
        %v1421 = vadd.f32 %v1374, %v1420
        %1422 = vmatmul.f32.gmra.mxu0 %v1280
        %v1423 = vpop.f32.mrf.mxu0
        %v1424 = vadd.f32 %v1374, %v1423
        %1425 = vmatmul.f32.gmra.mxu0 %v1295
        %v1426 = vpop.f32.mrf.mxu0
        %v1427 = vadd.f32 %v1374, %v1426
        %1428 = vmatmul.f32.gmra.mxu0 %v1310
        %v1429 = vpop.f32.mrf.mxu0
        %v1430 = vadd.f32 %v1374, %v1429
        %1431 = vmatmul.f32.gmra.mxu0 %v1325
        %v1432 = vpop.f32.mrf.mxu0
        %v1433 = vadd.f32 %v1374, %v1432
        %1434 = vmatmul.f32.gmra.mxu0 %v1340
        %v1435 = vpop.f32.mrf.mxu0
        %v1436 = vadd.f32 %v1374, %v1435
        %1437 = vmatmul.f32.gmra.mxu0 %v1355
        %v1438 = vpop.f32.mrf.mxu0
        %v1439 = vadd.f32 %v1374, %v1438
        %1440 = vdwg.mxu0
        %v1441 = vxor.u32 %v1394, 2147483648
        %v1442 = vxor.u32 %v1397, 2147483648
        %v1443 = vxor.u32 %v1400, 2147483648
        %v1444 = vxor.u32 %v1403, 2147483648
        %v1445 = vxor.u32 %v1406, 2147483648
        %v1446 = vxor.u32 %v1409, 2147483648
        %v1447 = vxor.u32 %v1412, 2147483648
        %v1448 = vxor.u32 %v1415, 2147483648
        %v1449 = vxor.u32 %v1418, 2147483648
        %v1450 = vxor.u32 %v1421, 2147483648
        %v1451 = vxor.u32 %v1424, 2147483648
        %v1452 = vxor.u32 %v1427, 2147483648
        %v1453 = vxor.u32 %v1430, 2147483648
        %v1454 = vxor.u32 %v1433, 2147483648
        %v1455 = vxor.u32 %v1436, 2147483648
        %v1456 = vxor.u32 %v1439, 2147483648
        %v1457 = vmul.f32 %v1441, 1.442695
        %v1458 = vpow.pop %v1457
        %v1459 = vmul.f32 %v1442, 1.442695
        %v1460 = vpow.pop %v1459
        %v1461 = vmul.f32 %v1443, 1.442695
        %v1462 = vpow.pop %v1461
        %v1463 = vmul.f32 %v1444, 1.442695
        %v1464 = vpow.pop %v1463
        %v1465 = vmul.f32 %v1445, 1.442695
        %v1466 = vpow.pop %v1465
        %v1467 = vmul.f32 %v1446, 1.442695
        %v1468 = vpow.pop %v1467
        %v1469 = vmul.f32 %v1447, 1.442695
        %v1470 = vpow.pop %v1469
        %v1471 = vmul.f32 %v1448, 1.442695
        %v1472 = vpow.pop %v1471
        %v1473 = vmul.f32 %v1449, 1.442695
        %v1474 = vpow.pop %v1473
        %v1475 = vmul.f32 %v1450, 1.442695
        %v1476 = vpow.pop %v1475
        %v1477 = vmul.f32 %v1451, 1.442695
        %v1478 = vpow.pop %v1477
        %v1479 = vmul.f32 %v1452, 1.442695
        %v1480 = vpow.pop %v1479
        %v1481 = vmul.f32 %v1453, 1.442695
        %v1482 = vpow.pop %v1481
        %v1483 = vmul.f32 %v1454, 1.442695
        %v1484 = vpow.pop %v1483
        %v1485 = vmul.f32 %v1455, 1.442695
        %v1486 = vpow.pop %v1485
        %v1487 = vmul.f32 %v1456, 1.442695
        %v1488 = vpow.pop %v1487
        %v1489 = vadd.f32 %v1458, 1.0
        %v1490 = vadd.f32 %v1460, 1.0
        %v1491 = vadd.f32 %v1462, 1.0
        %v1492 = vadd.f32 %v1464, 1.0
        %v1493 = vadd.f32 %v1466, 1.0
        %v1494 = vadd.f32 %v1468, 1.0
        %v1495 = vadd.f32 %v1470, 1.0
        %v1496 = vadd.f32 %v1472, 1.0
        %v1497 = vadd.f32 %v1474, 1.0
        %v1498 = vadd.f32 %v1476, 1.0
        %v1499 = vadd.f32 %v1478, 1.0
        %v1500 = vadd.f32 %v1480, 1.0
        %v1501 = vadd.f32 %v1482, 1.0
        %v1502 = vadd.f32 %v1484, 1.0
        %v1503 = vadd.f32 %v1486, 1.0
        %v1504 = vadd.f32 %v1488, 1.0
        %v1505 = vrcp.pop %v1489
        %v1506 = vmul.f32 %v1489, %v1505
        %v1507 = vsub.f32 1.0, %v1506
        %v1508 = vmul.f32 %v1505, %v1507
        %v1509 = vadd.f32 %v1505, %v1508
        %vm1510 = vweird.f32 %v1489
        %vm1511 = vweird.f32 %v1505
        %vm1512 = vmor %vm1510, %vm1511
        %v1513 = vsel %vm1512, %v1505, %v1509
        %v1514 = vand.u32 2147483647, %v1489
        %vm1515 = vcmp.eq.f32.partialorder %v1514, 8.507059e+37
        %v1516 = vand.u32 %v1489, 2147483648
        %v1517 = vor.u32 1.1754944e-38, %v1516
        %v1518 = vsel %vm1515, %v1517, %v1513
        %v1519 = vmul.f32 1.0, %v1518
        %v1520 = vrcp.pop %v1490
        %v1521 = vmul.f32 %v1490, %v1520
        %v1522 = vsub.f32 1.0, %v1521
        %v1523 = vmul.f32 %v1520, %v1522
        %v1524 = vadd.f32 %v1520, %v1523
        %vm1525 = vweird.f32 %v1490
        %vm1526 = vweird.f32 %v1520
        %vm1527 = vmor %vm1525, %vm1526
        %v1528 = vsel %vm1527, %v1520, %v1524
        %v1529 = vand.u32 2147483647, %v1490
        %vm1530 = vcmp.eq.f32.partialorder %v1529, 8.507059e+37
        %v1531 = vand.u32 %v1490, 2147483648
        %v1532 = vor.u32 1.1754944e-38, %v1531
        %v1533 = vsel %vm1530, %v1532, %v1528
        %v1534 = vmul.f32 1.0, %v1533
        %v1535 = vrcp.pop %v1491
        %v1536 = vmul.f32 %v1491, %v1535
        %v1537 = vsub.f32 1.0, %v1536
        %v1538 = vmul.f32 %v1535, %v1537
        %v1539 = vadd.f32 %v1535, %v1538
        %vm1540 = vweird.f32 %v1491
        %vm1541 = vweird.f32 %v1535
        %vm1542 = vmor %vm1540, %vm1541
        %v1543 = vsel %vm1542, %v1535, %v1539
        %v1544 = vand.u32 2147483647, %v1491
        %vm1545 = vcmp.eq.f32.partialorder %v1544, 8.507059e+37
        %v1546 = vand.u32 %v1491, 2147483648
        %v1547 = vor.u32 1.1754944e-38, %v1546
        %v1548 = vsel %vm1545, %v1547, %v1543
        %v1549 = vmul.f32 1.0, %v1548
        %v1550 = vrcp.pop %v1492
        %v1551 = vmul.f32 %v1492, %v1550
        %v1552 = vsub.f32 1.0, %v1551
        %v1553 = vmul.f32 %v1550, %v1552
        %v1554 = vadd.f32 %v1550, %v1553
        %vm1555 = vweird.f32 %v1492
        %vm1556 = vweird.f32 %v1550
        %vm1557 = vmor %vm1555, %vm1556
        %v1558 = vsel %vm1557, %v1550, %v1554
        %v1559 = vand.u32 2147483647, %v1492
        %vm1560 = vcmp.eq.f32.partialorder %v1559, 8.507059e+37
        %v1561 = vand.u32 %v1492, 2147483648
        %v1562 = vor.u32 1.1754944e-38, %v1561
        %v1563 = vsel %vm1560, %v1562, %v1558
        %v1564 = vmul.f32 1.0, %v1563
        %v1565 = vrcp.pop %v1493
        %v1566 = vmul.f32 %v1493, %v1565
        %v1567 = vsub.f32 1.0, %v1566
        %v1568 = vmul.f32 %v1565, %v1567
        %v1569 = vadd.f32 %v1565, %v1568
        %vm1570 = vweird.f32 %v1493
        %vm1571 = vweird.f32 %v1565
        %vm1572 = vmor %vm1570, %vm1571
        %v1573 = vsel %vm1572, %v1565, %v1569
        %v1574 = vand.u32 2147483647, %v1493
        %vm1575 = vcmp.eq.f32.partialorder %v1574, 8.507059e+37
        %v1576 = vand.u32 %v1493, 2147483648
        %v1577 = vor.u32 1.1754944e-38, %v1576
        %v1578 = vsel %vm1575, %v1577, %v1573
        %v1579 = vmul.f32 1.0, %v1578
        %v1580 = vrcp.pop %v1494
        %v1581 = vmul.f32 %v1494, %v1580
        %v1582 = vsub.f32 1.0, %v1581
        %v1583 = vmul.f32 %v1580, %v1582
        %v1584 = vadd.f32 %v1580, %v1583
        %vm1585 = vweird.f32 %v1494
        %vm1586 = vweird.f32 %v1580
        %vm1587 = vmor %vm1585, %vm1586
        %v1588 = vsel %vm1587, %v1580, %v1584
        %v1589 = vand.u32 2147483647, %v1494
        %vm1590 = vcmp.eq.f32.partialorder %v1589, 8.507059e+37
        %v1591 = vand.u32 %v1494, 2147483648
        %v1592 = vor.u32 1.1754944e-38, %v1591
        %v1593 = vsel %vm1590, %v1592, %v1588
        %v1594 = vmul.f32 1.0, %v1593
        %v1595 = vrcp.pop %v1495
        %v1596 = vmul.f32 %v1495, %v1595
        %v1597 = vsub.f32 1.0, %v1596
        %v1598 = vmul.f32 %v1595, %v1597
        %v1599 = vadd.f32 %v1595, %v1598
        %vm1600 = vweird.f32 %v1495
        %vm1601 = vweird.f32 %v1595
        %vm1602 = vmor %vm1600, %vm1601
        %v1603 = vsel %vm1602, %v1595, %v1599
        %v1604 = vand.u32 2147483647, %v1495
        %vm1605 = vcmp.eq.f32.partialorder %v1604, 8.507059e+37
        %v1606 = vand.u32 %v1495, 2147483648
        %v1607 = vor.u32 1.1754944e-38, %v1606
        %v1608 = vsel %vm1605, %v1607, %v1603
        %v1609 = vmul.f32 1.0, %v1608
        %v1610 = vrcp.pop %v1496
        %v1611 = vmul.f32 %v1496, %v1610
        %v1612 = vsub.f32 1.0, %v1611
        %v1613 = vmul.f32 %v1610, %v1612
        %v1614 = vadd.f32 %v1610, %v1613
        %vm1615 = vweird.f32 %v1496
        %vm1616 = vweird.f32 %v1610
        %vm1617 = vmor %vm1615, %vm1616
        %v1618 = vsel %vm1617, %v1610, %v1614
        %v1619 = vand.u32 2147483647, %v1496
        %vm1620 = vcmp.eq.f32.partialorder %v1619, 8.507059e+37
        %v1621 = vand.u32 %v1496, 2147483648
        %v1622 = vor.u32 1.1754944e-38, %v1621
        %v1623 = vsel %vm1620, %v1622, %v1618
        %v1624 = vmul.f32 1.0, %v1623
        %v1625 = vrcp.pop %v1497
        %v1626 = vmul.f32 %v1497, %v1625
        %v1627 = vsub.f32 1.0, %v1626
        %v1628 = vmul.f32 %v1625, %v1627
        %v1629 = vadd.f32 %v1625, %v1628
        %vm1630 = vweird.f32 %v1497
        %vm1631 = vweird.f32 %v1625
        %vm1632 = vmor %vm1630, %vm1631
        %v1633 = vsel %vm1632, %v1625, %v1629
        %v1634 = vand.u32 2147483647, %v1497
        %vm1635 = vcmp.eq.f32.partialorder %v1634, 8.507059e+37
        %v1636 = vand.u32 %v1497, 2147483648
        %v1637 = vor.u32 1.1754944e-38, %v1636
        %v1638 = vsel %vm1635, %v1637, %v1633
        %v1639 = vmul.f32 1.0, %v1638
        %v1640 = vrcp.pop %v1498
        %v1641 = vmul.f32 %v1498, %v1640
        %v1642 = vsub.f32 1.0, %v1641
        %v1643 = vmul.f32 %v1640, %v1642
        %v1644 = vadd.f32 %v1640, %v1643
        %vm1645 = vweird.f32 %v1498
        %vm1646 = vweird.f32 %v1640
        %vm1647 = vmor %vm1645, %vm1646
        %v1648 = vsel %vm1647, %v1640, %v1644
        %v1649 = vand.u32 2147483647, %v1498
        %vm1650 = vcmp.eq.f32.partialorder %v1649, 8.507059e+37
        %v1651 = vand.u32 %v1498, 2147483648
        %v1652 = vor.u32 1.1754944e-38, %v1651
        %v1653 = vsel %vm1650, %v1652, %v1648
        %v1654 = vmul.f32 1.0, %v1653
        %v1655 = vrcp.pop %v1499
        %v1656 = vmul.f32 %v1499, %v1655
        %v1657 = vsub.f32 1.0, %v1656
        %v1658 = vmul.f32 %v1655, %v1657
        %v1659 = vadd.f32 %v1655, %v1658
        %vm1660 = vweird.f32 %v1499
        %vm1661 = vweird.f32 %v1655
        %vm1662 = vmor %vm1660, %vm1661
        %v1663 = vsel %vm1662, %v1655, %v1659
        %v1664 = vand.u32 2147483647, %v1499
        %vm1665 = vcmp.eq.f32.partialorder %v1664, 8.507059e+37
        %v1666 = vand.u32 %v1499, 2147483648
        %v1667 = vor.u32 1.1754944e-38, %v1666
        %v1668 = vsel %vm1665, %v1667, %v1663
        %v1669 = vmul.f32 1.0, %v1668
        %v1670 = vrcp.pop %v1500
        %v1671 = vmul.f32 %v1500, %v1670
        %v1672 = vsub.f32 1.0, %v1671
        %v1673 = vmul.f32 %v1670, %v1672
        %v1674 = vadd.f32 %v1670, %v1673
        %vm1675 = vweird.f32 %v1500
        %vm1676 = vweird.f32 %v1670
        %vm1677 = vmor %vm1675, %vm1676
        %v1678 = vsel %vm1677, %v1670, %v1674
        %v1679 = vand.u32 2147483647, %v1500
        %vm1680 = vcmp.eq.f32.partialorder %v1679, 8.507059e+37
        %v1681 = vand.u32 %v1500, 2147483648
        %v1682 = vor.u32 1.1754944e-38, %v1681
        %v1683 = vsel %vm1680, %v1682, %v1678
        %v1684 = vmul.f32 1.0, %v1683
        %v1685 = vrcp.pop %v1501
        %v1686 = vmul.f32 %v1501, %v1685
        %v1687 = vsub.f32 1.0, %v1686
        %v1688 = vmul.f32 %v1685, %v1687
        %v1689 = vadd.f32 %v1685, %v1688
        %vm1690 = vweird.f32 %v1501
        %vm1691 = vweird.f32 %v1685
        %vm1692 = vmor %vm1690, %vm1691
        %v1693 = vsel %vm1692, %v1685, %v1689
        %v1694 = vand.u32 2147483647, %v1501
        %vm1695 = vcmp.eq.f32.partialorder %v1694, 8.507059e+37
        %v1696 = vand.u32 %v1501, 2147483648
        %v1697 = vor.u32 1.1754944e-38, %v1696
        %v1698 = vsel %vm1695, %v1697, %v1693
        %v1699 = vmul.f32 1.0, %v1698
        %v1700 = vrcp.pop %v1502
        %v1701 = vmul.f32 %v1502, %v1700
        %v1702 = vsub.f32 1.0, %v1701
        %v1703 = vmul.f32 %v1700, %v1702
        %v1704 = vadd.f32 %v1700, %v1703
        %vm1705 = vweird.f32 %v1502
        %vm1706 = vweird.f32 %v1700
        %vm1707 = vmor %vm1705, %vm1706
        %v1708 = vsel %vm1707, %v1700, %v1704
        %v1709 = vand.u32 2147483647, %v1502
        %vm1710 = vcmp.eq.f32.partialorder %v1709, 8.507059e+37
        %v1711 = vand.u32 %v1502, 2147483648
        %v1712 = vor.u32 1.1754944e-38, %v1711
        %v1713 = vsel %vm1710, %v1712, %v1708
        %v1714 = vmul.f32 1.0, %v1713
        %v1715 = vrcp.pop %v1503
        %v1716 = vmul.f32 %v1503, %v1715
        %v1717 = vsub.f32 1.0, %v1716
        %v1718 = vmul.f32 %v1715, %v1717
        %v1719 = vadd.f32 %v1715, %v1718
        %vm1720 = vweird.f32 %v1503
        %vm1721 = vweird.f32 %v1715
        %vm1722 = vmor %vm1720, %vm1721
        %v1723 = vsel %vm1722, %v1715, %v1719
        %v1724 = vand.u32 2147483647, %v1503
        %vm1725 = vcmp.eq.f32.partialorder %v1724, 8.507059e+37
        %v1726 = vand.u32 %v1503, 2147483648
        %v1727 = vor.u32 1.1754944e-38, %v1726
        %v1728 = vsel %vm1725, %v1727, %v1723
        %v1729 = vmul.f32 1.0, %v1728
        %v1730 = vrcp.pop %v1504
        %v1731 = vmul.f32 %v1504, %v1730
        %v1732 = vsub.f32 1.0, %v1731
        %v1733 = vmul.f32 %v1730, %v1732
        %v1734 = vadd.f32 %v1730, %v1733
        %vm1735 = vweird.f32 %v1504
        %vm1736 = vweird.f32 %v1730
        %vm1737 = vmor %vm1735, %vm1736
        %v1738 = vsel %vm1737, %v1730, %v1734
        %v1739 = vand.u32 2147483647, %v1504
        %vm1740 = vcmp.eq.f32.partialorder %v1739, 8.507059e+37
        %v1741 = vand.u32 %v1504, 2147483648
        %v1742 = vor.u32 1.1754944e-38, %v1741
        %v1743 = vsel %vm1740, %v1742, %v1738
        %v1744 = vmul.f32 1.0, %v1743
        %v1745 = vld [vmem:[#allocation10] sm:$0xff]
        %v1746 = vld [vmem:[#allocation10 + $0x8] sm:$0xff]
        %v1747 = vld [vmem:[#allocation10 + $0x10] sm:$0xff]
        %v1748 = vld [vmem:[#allocation10 + $0x18] sm:$0xff]
        %v1749 = vld [vmem:[#allocation10 + $0x20] sm:$0xff]
        %v1750 = vld [vmem:[#allocation10 + $0x28] sm:$0xff]
        %v1751 = vld [vmem:[#allocation10 + $0x30] sm:$0xff]
        %v1752 = vld [vmem:[#allocation10 + $0x38] sm:$0xff]
        %v1753 = vld [vmem:[#allocation10 + $0x40] sm:$0xff]
        %v1754 = vld [vmem:[#allocation10 + $0x48] sm:$0xff]
        %v1755 = vld [vmem:[#allocation10 + $0x50] sm:$0xff]
        %v1756 = vld [vmem:[#allocation10 + $0x58] sm:$0xff]
        %v1757 = vld [vmem:[#allocation10 + $0x60] sm:$0xff]
        %v1758 = vld [vmem:[#allocation10 + $0x68] sm:$0xff]
        %v1759 = vld [vmem:[#allocation10 + $0x70] sm:$0xff]
        %v1760 = vld [vmem:[#allocation10 + $0x78] sm:$0xff]
        %v1761 = vld [vmem:[%s8] sm:$0x1]
        %v1763 = vperm.slane %v1761, 0
        %1765 = vmatpush.msra.mxu0 %v1760
        %1766 = vmatpush.msra.mxu0 %v1759
        %1767 = vmatpush.msra.mxu0 %v1758
        %1768 = vmatpush.msra.mxu0 %v1757
        %1769 = vmatpush.msra.mxu0 %v1756
        %1770 = vmatpush.msra.mxu0 %v1755
        %1771 = vmatpush.msra.mxu0 %v1754
        %1772 = vmatpush.msra.mxu0 %v1753
        %1773 = vmatpush.msra.mxu0 %v1752
        %1774 = vmatpush.msra.mxu0 %v1751
        %1775 = vmatpush.msra.mxu0 %v1750
        %1776 = vmatpush.msra.mxu0 %v1749
        %1777 = vmatpush.msra.mxu0 %v1748
        %1778 = vmatpush.msra.mxu0 %v1747
        %1779 = vmatpush.msra.mxu0 %v1746
        %1780 = vmatpush.msra.mxu0 %v1745
        %1781 = vmatmul.f32.gmra.mxu0 %v1519
        %v1782 = vpop.f32.mrf.mxu0
        %v1783 = vadd.f32 %v1763, %v1782
        %1784 = vmatmul.f32.gmra.mxu0 %v1534
        %v1785 = vpop.f32.mrf.mxu0
        %v1786 = vadd.f32 %v1763, %v1785
        %1787 = vmatmul.f32.gmra.mxu0 %v1549
        %v1788 = vpop.f32.mrf.mxu0
        %v1789 = vadd.f32 %v1763, %v1788
        %1790 = vmatmul.f32.gmra.mxu0 %v1564
        %v1791 = vpop.f32.mrf.mxu0
        %v1792 = vadd.f32 %v1763, %v1791
        %1793 = vmatmul.f32.gmra.mxu0 %v1579
        %v1794 = vpop.f32.mrf.mxu0
        %v1795 = vadd.f32 %v1763, %v1794
        %1796 = vmatmul.f32.gmra.mxu0 %v1594
        %v1797 = vpop.f32.mrf.mxu0
        %v1798 = vadd.f32 %v1763, %v1797
        %1799 = vmatmul.f32.gmra.mxu0 %v1609
        %v1800 = vpop.f32.mrf.mxu0
        %v1801 = vadd.f32 %v1763, %v1800
        %1802 = vmatmul.f32.gmra.mxu0 %v1624
        %v1803 = vpop.f32.mrf.mxu0
        %v1804 = vadd.f32 %v1763, %v1803
        %1805 = vmatmul.f32.gmra.mxu0 %v1639
        %v1806 = vpop.f32.mrf.mxu0
        %v1807 = vadd.f32 %v1763, %v1806
        %1808 = vmatmul.f32.gmra.mxu0 %v1654
        %v1809 = vpop.f32.mrf.mxu0
        %v1810 = vadd.f32 %v1763, %v1809
        %1811 = vmatmul.f32.gmra.mxu0 %v1669
        %v1812 = vpop.f32.mrf.mxu0
        %v1813 = vadd.f32 %v1763, %v1812
        %1814 = vmatmul.f32.gmra.mxu0 %v1684
        %v1815 = vpop.f32.mrf.mxu0
        %v1816 = vadd.f32 %v1763, %v1815
        %1817 = vmatmul.f32.gmra.mxu0 %v1699
        %v1818 = vpop.f32.mrf.mxu0
        %v1819 = vadd.f32 %v1763, %v1818
        %1820 = vmatmul.f32.gmra.mxu0 %v1714
        %v1821 = vpop.f32.mrf.mxu0
        %v1822 = vadd.f32 %v1763, %v1821
        %1823 = vmatmul.f32.gmra.mxu0 %v1729
        %v1824 = vpop.f32.mrf.mxu0
        %v1825 = vadd.f32 %v1763, %v1824
        %1826 = vmatmul.f32.gmra.mxu0 %v1744
        %v1827 = vpop.f32.mrf.mxu0
        %v1828 = vadd.f32 %v1763, %v1827
        %1829 = vdwg.mxu0
        %v1830 = vxor.u32 %v1783, 2147483648
        %v1831 = vxor.u32 %v1786, 2147483648
        %v1832 = vxor.u32 %v1789, 2147483648
        %v1833 = vxor.u32 %v1792, 2147483648
        %v1834 = vxor.u32 %v1795, 2147483648
        %v1835 = vxor.u32 %v1798, 2147483648
        %v1836 = vxor.u32 %v1801, 2147483648
        %v1837 = vxor.u32 %v1804, 2147483648
        %v1838 = vxor.u32 %v1807, 2147483648
        %v1839 = vxor.u32 %v1810, 2147483648
        %v1840 = vxor.u32 %v1813, 2147483648
        %v1841 = vxor.u32 %v1816, 2147483648
        %v1842 = vxor.u32 %v1819, 2147483648
        %v1843 = vxor.u32 %v1822, 2147483648
        %v1844 = vxor.u32 %v1825, 2147483648
        %v1845 = vxor.u32 %v1828, 2147483648
        %v1846 = vmul.f32 %v1830, 1.442695
        %v1847 = vpow.pop %v1846
        %v1848 = vmul.f32 %v1831, 1.442695
        %v1849 = vpow.pop %v1848
        %v1850 = vmul.f32 %v1832, 1.442695
        %v1851 = vpow.pop %v1850
        %v1852 = vmul.f32 %v1833, 1.442695
        %v1853 = vpow.pop %v1852
        %v1854 = vmul.f32 %v1834, 1.442695
        %v1855 = vpow.pop %v1854
        %v1856 = vmul.f32 %v1835, 1.442695
        %v1857 = vpow.pop %v1856
        %v1858 = vmul.f32 %v1836, 1.442695
        %v1859 = vpow.pop %v1858
        %v1860 = vmul.f32 %v1837, 1.442695
        %v1861 = vpow.pop %v1860
        %v1862 = vmul.f32 %v1838, 1.442695
        %v1863 = vpow.pop %v1862
        %v1864 = vmul.f32 %v1839, 1.442695
        %v1865 = vpow.pop %v1864
        %v1866 = vmul.f32 %v1840, 1.442695
        %v1867 = vpow.pop %v1866
        %v1868 = vmul.f32 %v1841, 1.442695
        %v1869 = vpow.pop %v1868
        %v1870 = vmul.f32 %v1842, 1.442695
        %v1871 = vpow.pop %v1870
        %v1872 = vmul.f32 %v1843, 1.442695
        %v1873 = vpow.pop %v1872
        %v1874 = vmul.f32 %v1844, 1.442695
        %v1875 = vpow.pop %v1874
        %v1876 = vmul.f32 %v1845, 1.442695
        %v1877 = vpow.pop %v1876
        %v1878 = vadd.f32 %v1847, 1.0
        %v1879 = vadd.f32 %v1849, 1.0
        %v1880 = vadd.f32 %v1851, 1.0
        %v1881 = vadd.f32 %v1853, 1.0
        %v1882 = vadd.f32 %v1855, 1.0
        %v1883 = vadd.f32 %v1857, 1.0
        %v1884 = vadd.f32 %v1859, 1.0
        %v1885 = vadd.f32 %v1861, 1.0
        %v1886 = vadd.f32 %v1863, 1.0
        %v1887 = vadd.f32 %v1865, 1.0
        %v1888 = vadd.f32 %v1867, 1.0
        %v1889 = vadd.f32 %v1869, 1.0
        %v1890 = vadd.f32 %v1871, 1.0
        %v1891 = vadd.f32 %v1873, 1.0
        %v1892 = vadd.f32 %v1875, 1.0
        %v1893 = vadd.f32 %v1877, 1.0
        %v1894 = vrcp.pop %v1878
        %v1895 = vmul.f32 %v1878, %v1894
        %v1896 = vsub.f32 1.0, %v1895
        %v1897 = vmul.f32 %v1894, %v1896
        %v1898 = vadd.f32 %v1894, %v1897
        %vm1899 = vweird.f32 %v1878
        %vm1900 = vweird.f32 %v1894
        %vm1901 = vmor %vm1899, %vm1900
        %v1902 = vsel %vm1901, %v1894, %v1898
        %v1903 = vand.u32 2147483647, %v1878
        %vm1904 = vcmp.eq.f32.partialorder %v1903, 8.507059e+37
        %v1905 = vand.u32 %v1878, 2147483648
        %v1906 = vor.u32 1.1754944e-38, %v1905
        %v1907 = vsel %vm1904, %v1906, %v1902
        %v1908 = vmul.f32 1.0, %v1907
        %v1909 = vrcp.pop %v1879
        %v1910 = vmul.f32 %v1879, %v1909
        %v1911 = vsub.f32 1.0, %v1910
        %v1912 = vmul.f32 %v1909, %v1911
        %v1913 = vadd.f32 %v1909, %v1912
        %vm1914 = vweird.f32 %v1879
        %vm1915 = vweird.f32 %v1909
        %vm1916 = vmor %vm1914, %vm1915
        %v1917 = vsel %vm1916, %v1909, %v1913
        %v1918 = vand.u32 2147483647, %v1879
        %vm1919 = vcmp.eq.f32.partialorder %v1918, 8.507059e+37
        %v1920 = vand.u32 %v1879, 2147483648
        %v1921 = vor.u32 1.1754944e-38, %v1920
        %v1922 = vsel %vm1919, %v1921, %v1917
        %v1923 = vmul.f32 1.0, %v1922
        %v1924 = vrcp.pop %v1880
        %v1925 = vmul.f32 %v1880, %v1924
        %v1926 = vsub.f32 1.0, %v1925
        %v1927 = vmul.f32 %v1924, %v1926
        %v1928 = vadd.f32 %v1924, %v1927
        %vm1929 = vweird.f32 %v1880
        %vm1930 = vweird.f32 %v1924
        %vm1931 = vmor %vm1929, %vm1930
        %v1932 = vsel %vm1931, %v1924, %v1928
        %v1933 = vand.u32 2147483647, %v1880
        %vm1934 = vcmp.eq.f32.partialorder %v1933, 8.507059e+37
        %v1935 = vand.u32 %v1880, 2147483648
        %v1936 = vor.u32 1.1754944e-38, %v1935
        %v1937 = vsel %vm1934, %v1936, %v1932
        %v1938 = vmul.f32 1.0, %v1937
        %v1939 = vrcp.pop %v1881
        %v1940 = vmul.f32 %v1881, %v1939
        %v1941 = vsub.f32 1.0, %v1940
        %v1942 = vmul.f32 %v1939, %v1941
        %v1943 = vadd.f32 %v1939, %v1942
        %vm1944 = vweird.f32 %v1881
        %vm1945 = vweird.f32 %v1939
        %vm1946 = vmor %vm1944, %vm1945
        %v1947 = vsel %vm1946, %v1939, %v1943
        %v1948 = vand.u32 2147483647, %v1881
        %vm1949 = vcmp.eq.f32.partialorder %v1948, 8.507059e+37
        %v1950 = vand.u32 %v1881, 2147483648
        %v1951 = vor.u32 1.1754944e-38, %v1950
        %v1952 = vsel %vm1949, %v1951, %v1947
        %v1953 = vmul.f32 1.0, %v1952
        %v1954 = vrcp.pop %v1882
        %v1955 = vmul.f32 %v1882, %v1954
        %v1956 = vsub.f32 1.0, %v1955
        %v1957 = vmul.f32 %v1954, %v1956
        %v1958 = vadd.f32 %v1954, %v1957
        %vm1959 = vweird.f32 %v1882
        %vm1960 = vweird.f32 %v1954
        %vm1961 = vmor %vm1959, %vm1960
        %v1962 = vsel %vm1961, %v1954, %v1958
        %v1963 = vand.u32 2147483647, %v1882
        %vm1964 = vcmp.eq.f32.partialorder %v1963, 8.507059e+37
        %v1965 = vand.u32 %v1882, 2147483648
        %v1966 = vor.u32 1.1754944e-38, %v1965
        %v1967 = vsel %vm1964, %v1966, %v1962
        %v1968 = vmul.f32 1.0, %v1967
        %v1969 = vrcp.pop %v1883
        %v1970 = vmul.f32 %v1883, %v1969
        %v1971 = vsub.f32 1.0, %v1970
        %v1972 = vmul.f32 %v1969, %v1971
        %v1973 = vadd.f32 %v1969, %v1972
        %vm1974 = vweird.f32 %v1883
        %vm1975 = vweird.f32 %v1969
        %vm1976 = vmor %vm1974, %vm1975
        %v1977 = vsel %vm1976, %v1969, %v1973
        %v1978 = vand.u32 2147483647, %v1883
        %vm1979 = vcmp.eq.f32.partialorder %v1978, 8.507059e+37
        %v1980 = vand.u32 %v1883, 2147483648
        %v1981 = vor.u32 1.1754944e-38, %v1980
        %v1982 = vsel %vm1979, %v1981, %v1977
        %v1983 = vmul.f32 1.0, %v1982
        %v1984 = vrcp.pop %v1884
        %v1985 = vmul.f32 %v1884, %v1984
        %v1986 = vsub.f32 1.0, %v1985
        %v1987 = vmul.f32 %v1984, %v1986
        %v1988 = vadd.f32 %v1984, %v1987
        %vm1989 = vweird.f32 %v1884
        %vm1990 = vweird.f32 %v1984
        %vm1991 = vmor %vm1989, %vm1990
        %v1992 = vsel %vm1991, %v1984, %v1988
        %v1993 = vand.u32 2147483647, %v1884
        %vm1994 = vcmp.eq.f32.partialorder %v1993, 8.507059e+37
        %v1995 = vand.u32 %v1884, 2147483648
        %v1996 = vor.u32 1.1754944e-38, %v1995
        %v1997 = vsel %vm1994, %v1996, %v1992
        %v1998 = vmul.f32 1.0, %v1997
        %v1999 = vrcp.pop %v1885
        %v2000 = vmul.f32 %v1885, %v1999
        %v2001 = vsub.f32 1.0, %v2000
        %v2002 = vmul.f32 %v1999, %v2001
        %v2003 = vadd.f32 %v1999, %v2002
        %vm2004 = vweird.f32 %v1885
        %vm2005 = vweird.f32 %v1999
        %vm2006 = vmor %vm2004, %vm2005
        %v2007 = vsel %vm2006, %v1999, %v2003
        %v2008 = vand.u32 2147483647, %v1885
        %vm2009 = vcmp.eq.f32.partialorder %v2008, 8.507059e+37
        %v2010 = vand.u32 %v1885, 2147483648
        %v2011 = vor.u32 1.1754944e-38, %v2010
        %v2012 = vsel %vm2009, %v2011, %v2007
        %v2013 = vmul.f32 1.0, %v2012
        %v2014 = vrcp.pop %v1886
        %v2015 = vmul.f32 %v1886, %v2014
        %v2016 = vsub.f32 1.0, %v2015
        %v2017 = vmul.f32 %v2014, %v2016
        %v2018 = vadd.f32 %v2014, %v2017
        %vm2019 = vweird.f32 %v1886
        %vm2020 = vweird.f32 %v2014
        %vm2021 = vmor %vm2019, %vm2020
        %v2022 = vsel %vm2021, %v2014, %v2018
        %v2023 = vand.u32 2147483647, %v1886
        %vm2024 = vcmp.eq.f32.partialorder %v2023, 8.507059e+37
        %v2025 = vand.u32 %v1886, 2147483648
        %v2026 = vor.u32 1.1754944e-38, %v2025
        %v2027 = vsel %vm2024, %v2026, %v2022
        %v2028 = vmul.f32 1.0, %v2027
        %v2029 = vrcp.pop %v1887
        %v2030 = vmul.f32 %v1887, %v2029
        %v2031 = vsub.f32 1.0, %v2030
        %v2032 = vmul.f32 %v2029, %v2031
        %v2033 = vadd.f32 %v2029, %v2032
        %vm2034 = vweird.f32 %v1887
        %vm2035 = vweird.f32 %v2029
        %vm2036 = vmor %vm2034, %vm2035
        %v2037 = vsel %vm2036, %v2029, %v2033
        %v2038 = vand.u32 2147483647, %v1887
        %vm2039 = vcmp.eq.f32.partialorder %v2038, 8.507059e+37
        %v2040 = vand.u32 %v1887, 2147483648
        %v2041 = vor.u32 1.1754944e-38, %v2040
        %v2042 = vsel %vm2039, %v2041, %v2037
        %v2043 = vmul.f32 1.0, %v2042
        %v2044 = vrcp.pop %v1888
        %v2045 = vmul.f32 %v1888, %v2044
        %v2046 = vsub.f32 1.0, %v2045
        %v2047 = vmul.f32 %v2044, %v2046
        %v2048 = vadd.f32 %v2044, %v2047
        %vm2049 = vweird.f32 %v1888
        %vm2050 = vweird.f32 %v2044
        %vm2051 = vmor %vm2049, %vm2050
        %v2052 = vsel %vm2051, %v2044, %v2048
        %v2053 = vand.u32 2147483647, %v1888
        %vm2054 = vcmp.eq.f32.partialorder %v2053, 8.507059e+37
        %v2055 = vand.u32 %v1888, 2147483648
        %v2056 = vor.u32 1.1754944e-38, %v2055
        %v2057 = vsel %vm2054, %v2056, %v2052
        %v2058 = vmul.f32 1.0, %v2057
        %v2059 = vrcp.pop %v1889
        %v2060 = vmul.f32 %v1889, %v2059
        %v2061 = vsub.f32 1.0, %v2060
        %v2062 = vmul.f32 %v2059, %v2061
        %v2063 = vadd.f32 %v2059, %v2062
        %vm2064 = vweird.f32 %v1889
        %vm2065 = vweird.f32 %v2059
        %vm2066 = vmor %vm2064, %vm2065
        %v2067 = vsel %vm2066, %v2059, %v2063
        %v2068 = vand.u32 2147483647, %v1889
        %vm2069 = vcmp.eq.f32.partialorder %v2068, 8.507059e+37
        %v2070 = vand.u32 %v1889, 2147483648
        %v2071 = vor.u32 1.1754944e-38, %v2070
        %v2072 = vsel %vm2069, %v2071, %v2067
        %v2073 = vmul.f32 1.0, %v2072
        %v2074 = vrcp.pop %v1890
        %v2075 = vmul.f32 %v1890, %v2074
        %v2076 = vsub.f32 1.0, %v2075
        %v2077 = vmul.f32 %v2074, %v2076
        %v2078 = vadd.f32 %v2074, %v2077
        %vm2079 = vweird.f32 %v1890
        %vm2080 = vweird.f32 %v2074
        %vm2081 = vmor %vm2079, %vm2080
        %v2082 = vsel %vm2081, %v2074, %v2078
        %v2083 = vand.u32 2147483647, %v1890
        %vm2084 = vcmp.eq.f32.partialorder %v2083, 8.507059e+37
        %v2085 = vand.u32 %v1890, 2147483648
        %v2086 = vor.u32 1.1754944e-38, %v2085
        %v2087 = vsel %vm2084, %v2086, %v2082
        %v2088 = vmul.f32 1.0, %v2087
        %v2089 = vrcp.pop %v1891
        %v2090 = vmul.f32 %v1891, %v2089
        %v2091 = vsub.f32 1.0, %v2090
        %v2092 = vmul.f32 %v2089, %v2091
        %v2093 = vadd.f32 %v2089, %v2092
        %vm2094 = vweird.f32 %v1891
        %vm2095 = vweird.f32 %v2089
        %vm2096 = vmor %vm2094, %vm2095
        %v2097 = vsel %vm2096, %v2089, %v2093
        %v2098 = vand.u32 2147483647, %v1891
        %vm2099 = vcmp.eq.f32.partialorder %v2098, 8.507059e+37
        %v2100 = vand.u32 %v1891, 2147483648
        %v2101 = vor.u32 1.1754944e-38, %v2100
        %v2102 = vsel %vm2099, %v2101, %v2097
        %v2103 = vmul.f32 1.0, %v2102
        %v2104 = vrcp.pop %v1892
        %v2105 = vmul.f32 %v1892, %v2104
        %v2106 = vsub.f32 1.0, %v2105
        %v2107 = vmul.f32 %v2104, %v2106
        %v2108 = vadd.f32 %v2104, %v2107
        %vm2109 = vweird.f32 %v1892
        %vm2110 = vweird.f32 %v2104
        %vm2111 = vmor %vm2109, %vm2110
        %v2112 = vsel %vm2111, %v2104, %v2108
        %v2113 = vand.u32 2147483647, %v1892
        %vm2114 = vcmp.eq.f32.partialorder %v2113, 8.507059e+37
        %v2115 = vand.u32 %v1892, 2147483648
        %v2116 = vor.u32 1.1754944e-38, %v2115
        %v2117 = vsel %vm2114, %v2116, %v2112
        %v2118 = vmul.f32 1.0, %v2117
        %v2119 = vrcp.pop %v1893
        %v2120 = vmul.f32 %v1893, %v2119
        %v2121 = vsub.f32 1.0, %v2120
        %v2122 = vmul.f32 %v2119, %v2121
        %v2123 = vadd.f32 %v2119, %v2122
        %vm2124 = vweird.f32 %v1893
        %vm2125 = vweird.f32 %v2119
        %vm2126 = vmor %vm2124, %vm2125
        %v2127 = vsel %vm2126, %v2119, %v2123
        %v2128 = vand.u32 2147483647, %v1893
        %vm2129 = vcmp.eq.f32.partialorder %v2128, 8.507059e+37
        %v2130 = vand.u32 %v1893, 2147483648
        %v2131 = vor.u32 1.1754944e-38, %v2130
        %v2132 = vsel %vm2129, %v2131, %v2127
        %v2133 = vmul.f32 1.0, %v2132
        %v2134 = vld [vmem:[#allocation11] sm:$0xff]
        %v2135 = vld [vmem:[#allocation11 + $0x8] sm:$0xff]
        %v2136 = vld [vmem:[#allocation11 + $0x10] sm:$0xff]
        %v2137 = vld [vmem:[#allocation11 + $0x18] sm:$0xff]
        %v2138 = vld [vmem:[#allocation11 + $0x20] sm:$0xff]
        %v2139 = vld [vmem:[#allocation11 + $0x28] sm:$0xff]
        %v2140 = vld [vmem:[#allocation11 + $0x30] sm:$0xff]
        %v2141 = vld [vmem:[#allocation11 + $0x38] sm:$0xff]
        %v2142 = vld [vmem:[#allocation11 + $0x40] sm:$0xff]
        %v2143 = vld [vmem:[#allocation11 + $0x48] sm:$0xff]
        %v2144 = vld [vmem:[#allocation11 + $0x50] sm:$0xff]
        %v2145 = vld [vmem:[#allocation11 + $0x58] sm:$0xff]
        %v2146 = vld [vmem:[#allocation11 + $0x60] sm:$0xff]
        %v2147 = vld [vmem:[#allocation11 + $0x68] sm:$0xff]
        %v2148 = vld [vmem:[#allocation11 + $0x70] sm:$0xff]
        %v2149 = vld [vmem:[#allocation11 + $0x78] sm:$0xff]
        %v2150 = vld [vmem:[%s10] sm:$0x1]
        %v2152 = vperm.slane %v2150, 0
        %2154 = vmatpush.msra.mxu0 %v2149
        %2155 = vmatpush.msra.mxu0 %v2148
        %2156 = vmatpush.msra.mxu0 %v2147
        %2157 = vmatpush.msra.mxu0 %v2146
        %2158 = vmatpush.msra.mxu0 %v2145
        %2159 = vmatpush.msra.mxu0 %v2144
        %2160 = vmatpush.msra.mxu0 %v2143
        %2161 = vmatpush.msra.mxu0 %v2142
        %2162 = vmatpush.msra.mxu0 %v2141
        %2163 = vmatpush.msra.mxu0 %v2140
        %2164 = vmatpush.msra.mxu0 %v2139
        %2165 = vmatpush.msra.mxu0 %v2138
        %2166 = vmatpush.msra.mxu0 %v2137
        %2167 = vmatpush.msra.mxu0 %v2136
        %2168 = vmatpush.msra.mxu0 %v2135
        %2169 = vmatpush.msra.mxu0 %v2134
        %2170 = vmatmul.f32.gmra.mxu0 %v1908
        %v2171 = vpop.f32.mrf.mxu0
        %v2172 = vadd.f32 %v2152, %v2171
        %2173 = vmatmul.f32.gmra.mxu0 %v1923
        %v2174 = vpop.f32.mrf.mxu0
        %v2175 = vadd.f32 %v2152, %v2174
        %2176 = vmatmul.f32.gmra.mxu0 %v1938
        %v2177 = vpop.f32.mrf.mxu0
        %v2178 = vadd.f32 %v2152, %v2177
        %2179 = vmatmul.f32.gmra.mxu0 %v1953
        %v2180 = vpop.f32.mrf.mxu0
        %v2181 = vadd.f32 %v2152, %v2180
        %2182 = vmatmul.f32.gmra.mxu0 %v1968
        %v2183 = vpop.f32.mrf.mxu0
        %v2184 = vadd.f32 %v2152, %v2183
        %2185 = vmatmul.f32.gmra.mxu0 %v1983
        %v2186 = vpop.f32.mrf.mxu0
        %v2187 = vadd.f32 %v2152, %v2186
        %2188 = vmatmul.f32.gmra.mxu0 %v1998
        %v2189 = vpop.f32.mrf.mxu0
        %v2190 = vadd.f32 %v2152, %v2189
        %2191 = vmatmul.f32.gmra.mxu0 %v2013
        %v2192 = vpop.f32.mrf.mxu0
        %v2193 = vadd.f32 %v2152, %v2192
        %2194 = vmatmul.f32.gmra.mxu0 %v2028
        %v2195 = vpop.f32.mrf.mxu0
        %v2196 = vadd.f32 %v2152, %v2195
        %2197 = vmatmul.f32.gmra.mxu0 %v2043
        %v2198 = vpop.f32.mrf.mxu0
        %v2199 = vadd.f32 %v2152, %v2198
        %2200 = vmatmul.f32.gmra.mxu0 %v2058
        %v2201 = vpop.f32.mrf.mxu0
        %v2202 = vadd.f32 %v2152, %v2201
        %2203 = vmatmul.f32.gmra.mxu0 %v2073
        %v2204 = vpop.f32.mrf.mxu0
        %v2205 = vadd.f32 %v2152, %v2204
        %2206 = vmatmul.f32.gmra.mxu0 %v2088
        %v2207 = vpop.f32.mrf.mxu0
        %v2208 = vadd.f32 %v2152, %v2207
        %2209 = vmatmul.f32.gmra.mxu0 %v2103
        %v2210 = vpop.f32.mrf.mxu0
        %v2211 = vadd.f32 %v2152, %v2210
        %2212 = vmatmul.f32.gmra.mxu0 %v2118
        %v2213 = vpop.f32.mrf.mxu0
        %v2214 = vadd.f32 %v2152, %v2213
        %2215 = vmatmul.f32.gmra.mxu0 %v2133
        %v2216 = vpop.f32.mrf.mxu0
        %v2217 = vadd.f32 %v2152, %v2216
        %2218 = vdwg.mxu0
        %v2219 = vxor.u32 %v2172, 2147483648
        %v2220 = vxor.u32 %v2175, 2147483648
        %v2221 = vxor.u32 %v2178, 2147483648
        %v2222 = vxor.u32 %v2181, 2147483648
        %v2223 = vxor.u32 %v2184, 2147483648
        %v2224 = vxor.u32 %v2187, 2147483648
        %v2225 = vxor.u32 %v2190, 2147483648
        %v2226 = vxor.u32 %v2193, 2147483648
        %v2227 = vxor.u32 %v2196, 2147483648
        %v2228 = vxor.u32 %v2199, 2147483648
        %v2229 = vxor.u32 %v2202, 2147483648
        %v2230 = vxor.u32 %v2205, 2147483648
        %v2231 = vxor.u32 %v2208, 2147483648
        %v2232 = vxor.u32 %v2211, 2147483648
        %v2233 = vxor.u32 %v2214, 2147483648
        %v2234 = vxor.u32 %v2217, 2147483648
        %v2235 = vmul.f32 %v2219, 1.442695
        %v2236 = vpow.pop %v2235
        %v2237 = vmul.f32 %v2220, 1.442695
        %v2238 = vpow.pop %v2237
        %v2239 = vmul.f32 %v2221, 1.442695
        %v2240 = vpow.pop %v2239
        %v2241 = vmul.f32 %v2222, 1.442695
        %v2242 = vpow.pop %v2241
        %v2243 = vmul.f32 %v2223, 1.442695
        %v2244 = vpow.pop %v2243
        %v2245 = vmul.f32 %v2224, 1.442695
        %v2246 = vpow.pop %v2245
        %v2247 = vmul.f32 %v2225, 1.442695
        %v2248 = vpow.pop %v2247
        %v2249 = vmul.f32 %v2226, 1.442695
        %v2250 = vpow.pop %v2249
        %v2251 = vmul.f32 %v2227, 1.442695
        %v2252 = vpow.pop %v2251
        %v2253 = vmul.f32 %v2228, 1.442695
        %v2254 = vpow.pop %v2253
        %v2255 = vmul.f32 %v2229, 1.442695
        %v2256 = vpow.pop %v2255
        %v2257 = vmul.f32 %v2230, 1.442695
        %v2258 = vpow.pop %v2257
        %v2259 = vmul.f32 %v2231, 1.442695
        %v2260 = vpow.pop %v2259
        %v2261 = vmul.f32 %v2232, 1.442695
        %v2262 = vpow.pop %v2261
        %v2263 = vmul.f32 %v2233, 1.442695
        %v2264 = vpow.pop %v2263
        %v2265 = vmul.f32 %v2234, 1.442695
        %v2266 = vpow.pop %v2265
        %v2267 = vadd.f32 %v2236, 1.0
        %v2268 = vadd.f32 %v2238, 1.0
        %v2269 = vadd.f32 %v2240, 1.0
        %v2270 = vadd.f32 %v2242, 1.0
        %v2271 = vadd.f32 %v2244, 1.0
        %v2272 = vadd.f32 %v2246, 1.0
        %v2273 = vadd.f32 %v2248, 1.0
        %v2274 = vadd.f32 %v2250, 1.0
        %v2275 = vadd.f32 %v2252, 1.0
        %v2276 = vadd.f32 %v2254, 1.0
        %v2277 = vadd.f32 %v2256, 1.0
        %v2278 = vadd.f32 %v2258, 1.0
        %v2279 = vadd.f32 %v2260, 1.0
        %v2280 = vadd.f32 %v2262, 1.0
        %v2281 = vadd.f32 %v2264, 1.0
        %v2282 = vadd.f32 %v2266, 1.0
        %v2283 = vrcp.pop %v2267
        %v2284 = vmul.f32 %v2267, %v2283
        %v2285 = vsub.f32 1.0, %v2284
        %v2286 = vmul.f32 %v2283, %v2285
        %v2287 = vadd.f32 %v2283, %v2286
        %vm2288 = vweird.f32 %v2267
        %vm2289 = vweird.f32 %v2283
        %vm2290 = vmor %vm2288, %vm2289
        %v2291 = vsel %vm2290, %v2283, %v2287
        %v2292 = vand.u32 2147483647, %v2267
        %vm2293 = vcmp.eq.f32.partialorder %v2292, 8.507059e+37
        %v2294 = vand.u32 %v2267, 2147483648
        %v2295 = vor.u32 1.1754944e-38, %v2294
        %v2296 = vsel %vm2293, %v2295, %v2291
        %v2297 = vmul.f32 1.0, %v2296
        %v2298 = vrcp.pop %v2268
        %v2299 = vmul.f32 %v2268, %v2298
        %v2300 = vsub.f32 1.0, %v2299
        %v2301 = vmul.f32 %v2298, %v2300
        %v2302 = vadd.f32 %v2298, %v2301
        %vm2303 = vweird.f32 %v2268
        %vm2304 = vweird.f32 %v2298
        %vm2305 = vmor %vm2303, %vm2304
        %v2306 = vsel %vm2305, %v2298, %v2302
        %v2307 = vand.u32 2147483647, %v2268
        %vm2308 = vcmp.eq.f32.partialorder %v2307, 8.507059e+37
        %v2309 = vand.u32 %v2268, 2147483648
        %v2310 = vor.u32 1.1754944e-38, %v2309
        %v2311 = vsel %vm2308, %v2310, %v2306
        %v2312 = vmul.f32 1.0, %v2311
        %v2313 = vrcp.pop %v2269
        %v2314 = vmul.f32 %v2269, %v2313
        %v2315 = vsub.f32 1.0, %v2314
        %v2316 = vmul.f32 %v2313, %v2315
        %v2317 = vadd.f32 %v2313, %v2316
        %vm2318 = vweird.f32 %v2269
        %vm2319 = vweird.f32 %v2313
        %vm2320 = vmor %vm2318, %vm2319
        %v2321 = vsel %vm2320, %v2313, %v2317
        %v2322 = vand.u32 2147483647, %v2269
        %vm2323 = vcmp.eq.f32.partialorder %v2322, 8.507059e+37
        %v2324 = vand.u32 %v2269, 2147483648
        %v2325 = vor.u32 1.1754944e-38, %v2324
        %v2326 = vsel %vm2323, %v2325, %v2321
        %v2327 = vmul.f32 1.0, %v2326
        %v2328 = vrcp.pop %v2270
        %v2329 = vmul.f32 %v2270, %v2328
        %v2330 = vsub.f32 1.0, %v2329
        %v2331 = vmul.f32 %v2328, %v2330
        %v2332 = vadd.f32 %v2328, %v2331
        %vm2333 = vweird.f32 %v2270
        %vm2334 = vweird.f32 %v2328
        %vm2335 = vmor %vm2333, %vm2334
        %v2336 = vsel %vm2335, %v2328, %v2332
        %v2337 = vand.u32 2147483647, %v2270
        %vm2338 = vcmp.eq.f32.partialorder %v2337, 8.507059e+37
        %v2339 = vand.u32 %v2270, 2147483648
        %v2340 = vor.u32 1.1754944e-38, %v2339
        %v2341 = vsel %vm2338, %v2340, %v2336
        %v2342 = vmul.f32 1.0, %v2341
        %v2343 = vrcp.pop %v2271
        %v2344 = vmul.f32 %v2271, %v2343
        %v2345 = vsub.f32 1.0, %v2344
        %v2346 = vmul.f32 %v2343, %v2345
        %v2347 = vadd.f32 %v2343, %v2346
        %vm2348 = vweird.f32 %v2271
        %vm2349 = vweird.f32 %v2343
        %vm2350 = vmor %vm2348, %vm2349
        %v2351 = vsel %vm2350, %v2343, %v2347
        %v2352 = vand.u32 2147483647, %v2271
        %vm2353 = vcmp.eq.f32.partialorder %v2352, 8.507059e+37
        %v2354 = vand.u32 %v2271, 2147483648
        %v2355 = vor.u32 1.1754944e-38, %v2354
        %v2356 = vsel %vm2353, %v2355, %v2351
        %v2357 = vmul.f32 1.0, %v2356
        %v2358 = vrcp.pop %v2272
        %v2359 = vmul.f32 %v2272, %v2358
        %v2360 = vsub.f32 1.0, %v2359
        %v2361 = vmul.f32 %v2358, %v2360
        %v2362 = vadd.f32 %v2358, %v2361
        %vm2363 = vweird.f32 %v2272
        %vm2364 = vweird.f32 %v2358
        %vm2365 = vmor %vm2363, %vm2364
        %v2366 = vsel %vm2365, %v2358, %v2362
        %v2367 = vand.u32 2147483647, %v2272
        %vm2368 = vcmp.eq.f32.partialorder %v2367, 8.507059e+37
        %v2369 = vand.u32 %v2272, 2147483648
        %v2370 = vor.u32 1.1754944e-38, %v2369
        %v2371 = vsel %vm2368, %v2370, %v2366
        %v2372 = vmul.f32 1.0, %v2371
        %v2373 = vrcp.pop %v2273
        %v2374 = vmul.f32 %v2273, %v2373
        %v2375 = vsub.f32 1.0, %v2374
        %v2376 = vmul.f32 %v2373, %v2375
        %v2377 = vadd.f32 %v2373, %v2376
        %vm2378 = vweird.f32 %v2273
        %vm2379 = vweird.f32 %v2373
        %vm2380 = vmor %vm2378, %vm2379
        %v2381 = vsel %vm2380, %v2373, %v2377
        %v2382 = vand.u32 2147483647, %v2273
        %vm2383 = vcmp.eq.f32.partialorder %v2382, 8.507059e+37
        %v2384 = vand.u32 %v2273, 2147483648
        %v2385 = vor.u32 1.1754944e-38, %v2384
        %v2386 = vsel %vm2383, %v2385, %v2381
        %v2387 = vmul.f32 1.0, %v2386
        %v2388 = vrcp.pop %v2274
        %v2389 = vmul.f32 %v2274, %v2388
        %v2390 = vsub.f32 1.0, %v2389
        %v2391 = vmul.f32 %v2388, %v2390
        %v2392 = vadd.f32 %v2388, %v2391
        %vm2393 = vweird.f32 %v2274
        %vm2394 = vweird.f32 %v2388
        %vm2395 = vmor %vm2393, %vm2394
        %v2396 = vsel %vm2395, %v2388, %v2392
        %v2397 = vand.u32 2147483647, %v2274
        %vm2398 = vcmp.eq.f32.partialorder %v2397, 8.507059e+37
        %v2399 = vand.u32 %v2274, 2147483648
        %v2400 = vor.u32 1.1754944e-38, %v2399
        %v2401 = vsel %vm2398, %v2400, %v2396
        %v2402 = vmul.f32 1.0, %v2401
        %v2403 = vrcp.pop %v2275
        %v2404 = vmul.f32 %v2275, %v2403
        %v2405 = vsub.f32 1.0, %v2404
        %v2406 = vmul.f32 %v2403, %v2405
        %v2407 = vadd.f32 %v2403, %v2406
        %vm2408 = vweird.f32 %v2275
        %vm2409 = vweird.f32 %v2403
        %vm2410 = vmor %vm2408, %vm2409
        %v2411 = vsel %vm2410, %v2403, %v2407
        %v2412 = vand.u32 2147483647, %v2275
        %vm2413 = vcmp.eq.f32.partialorder %v2412, 8.507059e+37
        %v2414 = vand.u32 %v2275, 2147483648
        %v2415 = vor.u32 1.1754944e-38, %v2414
        %v2416 = vsel %vm2413, %v2415, %v2411
        %v2417 = vmul.f32 1.0, %v2416
        %v2418 = vrcp.pop %v2276
        %v2419 = vmul.f32 %v2276, %v2418
        %v2420 = vsub.f32 1.0, %v2419
        %v2421 = vmul.f32 %v2418, %v2420
        %v2422 = vadd.f32 %v2418, %v2421
        %vm2423 = vweird.f32 %v2276
        %vm2424 = vweird.f32 %v2418
        %vm2425 = vmor %vm2423, %vm2424
        %v2426 = vsel %vm2425, %v2418, %v2422
        %v2427 = vand.u32 2147483647, %v2276
        %vm2428 = vcmp.eq.f32.partialorder %v2427, 8.507059e+37
        %v2429 = vand.u32 %v2276, 2147483648
        %v2430 = vor.u32 1.1754944e-38, %v2429
        %v2431 = vsel %vm2428, %v2430, %v2426
        %v2432 = vmul.f32 1.0, %v2431
        %v2433 = vrcp.pop %v2277
        %v2434 = vmul.f32 %v2277, %v2433
        %v2435 = vsub.f32 1.0, %v2434
        %v2436 = vmul.f32 %v2433, %v2435
        %v2437 = vadd.f32 %v2433, %v2436
        %vm2438 = vweird.f32 %v2277
        %vm2439 = vweird.f32 %v2433
        %vm2440 = vmor %vm2438, %vm2439
        %v2441 = vsel %vm2440, %v2433, %v2437
        %v2442 = vand.u32 2147483647, %v2277
        %vm2443 = vcmp.eq.f32.partialorder %v2442, 8.507059e+37
        %v2444 = vand.u32 %v2277, 2147483648
        %v2445 = vor.u32 1.1754944e-38, %v2444
        %v2446 = vsel %vm2443, %v2445, %v2441
        %v2447 = vmul.f32 1.0, %v2446
        %v2448 = vrcp.pop %v2278
        %v2449 = vmul.f32 %v2278, %v2448
        %v2450 = vsub.f32 1.0, %v2449
        %v2451 = vmul.f32 %v2448, %v2450
        %v2452 = vadd.f32 %v2448, %v2451
        %vm2453 = vweird.f32 %v2278
        %vm2454 = vweird.f32 %v2448
        %vm2455 = vmor %vm2453, %vm2454
        %v2456 = vsel %vm2455, %v2448, %v2452
        %v2457 = vand.u32 2147483647, %v2278
        %vm2458 = vcmp.eq.f32.partialorder %v2457, 8.507059e+37
        %v2459 = vand.u32 %v2278, 2147483648
        %v2460 = vor.u32 1.1754944e-38, %v2459
        %v2461 = vsel %vm2458, %v2460, %v2456
        %v2462 = vmul.f32 1.0, %v2461
        %v2463 = vrcp.pop %v2279
        %v2464 = vmul.f32 %v2279, %v2463
        %v2465 = vsub.f32 1.0, %v2464
        %v2466 = vmul.f32 %v2463, %v2465
        %v2467 = vadd.f32 %v2463, %v2466
        %vm2468 = vweird.f32 %v2279
        %vm2469 = vweird.f32 %v2463
        %vm2470 = vmor %vm2468, %vm2469
        %v2471 = vsel %vm2470, %v2463, %v2467
        %v2472 = vand.u32 2147483647, %v2279
        %vm2473 = vcmp.eq.f32.partialorder %v2472, 8.507059e+37
        %v2474 = vand.u32 %v2279, 2147483648
        %v2475 = vor.u32 1.1754944e-38, %v2474
        %v2476 = vsel %vm2473, %v2475, %v2471
        %v2477 = vmul.f32 1.0, %v2476
        %v2478 = vrcp.pop %v2280
        %v2479 = vmul.f32 %v2280, %v2478
        %v2480 = vsub.f32 1.0, %v2479
        %v2481 = vmul.f32 %v2478, %v2480
        %v2482 = vadd.f32 %v2478, %v2481
        %vm2483 = vweird.f32 %v2280
        %vm2484 = vweird.f32 %v2478
        %vm2485 = vmor %vm2483, %vm2484
        %v2486 = vsel %vm2485, %v2478, %v2482
        %v2487 = vand.u32 2147483647, %v2280
        %vm2488 = vcmp.eq.f32.partialorder %v2487, 8.507059e+37
        %v2489 = vand.u32 %v2280, 2147483648
        %v2490 = vor.u32 1.1754944e-38, %v2489
        %v2491 = vsel %vm2488, %v2490, %v2486
        %v2492 = vmul.f32 1.0, %v2491
        %v2493 = vrcp.pop %v2281
        %v2494 = vmul.f32 %v2281, %v2493
        %v2495 = vsub.f32 1.0, %v2494
        %v2496 = vmul.f32 %v2493, %v2495
        %v2497 = vadd.f32 %v2493, %v2496
        %vm2498 = vweird.f32 %v2281
        %vm2499 = vweird.f32 %v2493
        %vm2500 = vmor %vm2498, %vm2499
        %v2501 = vsel %vm2500, %v2493, %v2497
        %v2502 = vand.u32 2147483647, %v2281
        %vm2503 = vcmp.eq.f32.partialorder %v2502, 8.507059e+37
        %v2504 = vand.u32 %v2281, 2147483648
        %v2505 = vor.u32 1.1754944e-38, %v2504
        %v2506 = vsel %vm2503, %v2505, %v2501
        %v2507 = vmul.f32 1.0, %v2506
        %v2508 = vrcp.pop %v2282
        %v2509 = vmul.f32 %v2282, %v2508
        %v2510 = vsub.f32 1.0, %v2509
        %v2511 = vmul.f32 %v2508, %v2510
        %v2512 = vadd.f32 %v2508, %v2511
        %vm2513 = vweird.f32 %v2282
        %vm2514 = vweird.f32 %v2508
        %vm2515 = vmor %vm2513, %vm2514
        %v2516 = vsel %vm2515, %v2508, %v2512
        %v2517 = vand.u32 2147483647, %v2282
        %vm2518 = vcmp.eq.f32.partialorder %v2517, 8.507059e+37
        %v2519 = vand.u32 %v2282, 2147483648
        %v2520 = vor.u32 1.1754944e-38, %v2519
        %v2521 = vsel %vm2518, %v2520, %v2516
        %v2522 = vmul.f32 1.0, %v2521
        %v2523 = vld [vmem:[#allocation13] sm:$0xff]
        %v2524 = vld [vmem:[#allocation13 + $0x8] sm:$0xff]
        %v2525 = vld [vmem:[#allocation13 + $0x10] sm:$0xff]
        %v2526 = vld [vmem:[#allocation13 + $0x18] sm:$0xff]
        %v2527 = vld [vmem:[#allocation13 + $0x20] sm:$0xff]
        %v2528 = vld [vmem:[#allocation13 + $0x28] sm:$0xff]
        %v2529 = vld [vmem:[#allocation13 + $0x30] sm:$0xff]
        %v2530 = vld [vmem:[#allocation13 + $0x38] sm:$0xff]
        %v2531 = vld [vmem:[#allocation13 + $0x40] sm:$0xff]
        %v2532 = vld [vmem:[#allocation13 + $0x48] sm:$0xff]
        %v2533 = vld [vmem:[#allocation13 + $0x50] sm:$0xff]
        %v2534 = vld [vmem:[#allocation13 + $0x58] sm:$0xff]
        %v2535 = vld [vmem:[#allocation13 + $0x60] sm:$0xff]
        %v2536 = vld [vmem:[#allocation13 + $0x68] sm:$0xff]
        %v2537 = vld [vmem:[#allocation13 + $0x70] sm:$0xff]
        %v2538 = vld [vmem:[#allocation13 + $0x78] sm:$0xff]
        %v2539 = vld [vmem:[%s12] sm:$0x1]
        %v2541 = vperm.slane %v2539, 0
        %2543 = vmatpush.msra.mxu0 %v2538
        %2544 = vmatpush.msra.mxu0 %v2537
        %2545 = vmatpush.msra.mxu0 %v2536
        %2546 = vmatpush.msra.mxu0 %v2535
        %2547 = vmatpush.msra.mxu0 %v2534
        %2548 = vmatpush.msra.mxu0 %v2533
        %2549 = vmatpush.msra.mxu0 %v2532
        %2550 = vmatpush.msra.mxu0 %v2531
        %2551 = vmatpush.msra.mxu0 %v2530
        %2552 = vmatpush.msra.mxu0 %v2529
        %2553 = vmatpush.msra.mxu0 %v2528
        %2554 = vmatpush.msra.mxu0 %v2527
        %2555 = vmatpush.msra.mxu0 %v2526
        %2556 = vmatpush.msra.mxu0 %v2525
        %2557 = vmatpush.msra.mxu0 %v2524
        %2558 = vmatpush.msra.mxu0 %v2523
        %2559 = vmatmul.f32.gmra.mxu0 %v2297
        %v2560 = vpop.f32.mrf.mxu0
        %v2561 = vadd.f32 %v2541, %v2560
        %2562 = vmatmul.f32.gmra.mxu0 %v2312
        %v2563 = vpop.f32.mrf.mxu0
        %v2564 = vadd.f32 %v2541, %v2563
        %2565 = vmatmul.f32.gmra.mxu0 %v2327
        %v2566 = vpop.f32.mrf.mxu0
        %v2567 = vadd.f32 %v2541, %v2566
        %2568 = vmatmul.f32.gmra.mxu0 %v2342
        %v2569 = vpop.f32.mrf.mxu0
        %v2570 = vadd.f32 %v2541, %v2569
        %2571 = vmatmul.f32.gmra.mxu0 %v2357
        %v2572 = vpop.f32.mrf.mxu0
        %v2573 = vadd.f32 %v2541, %v2572
        %2574 = vmatmul.f32.gmra.mxu0 %v2372
        %v2575 = vpop.f32.mrf.mxu0
        %v2576 = vadd.f32 %v2541, %v2575
        %2577 = vmatmul.f32.gmra.mxu0 %v2387
        %v2578 = vpop.f32.mrf.mxu0
        %v2579 = vadd.f32 %v2541, %v2578
        %2580 = vmatmul.f32.gmra.mxu0 %v2402
        %v2581 = vpop.f32.mrf.mxu0
        %v2582 = vadd.f32 %v2541, %v2581
        %2583 = vmatmul.f32.gmra.mxu0 %v2417
        %v2584 = vpop.f32.mrf.mxu0
        %v2585 = vadd.f32 %v2541, %v2584
        %2586 = vmatmul.f32.gmra.mxu0 %v2432
        %v2587 = vpop.f32.mrf.mxu0
        %v2588 = vadd.f32 %v2541, %v2587
        %2589 = vmatmul.f32.gmra.mxu0 %v2447
        %v2590 = vpop.f32.mrf.mxu0
        %v2591 = vadd.f32 %v2541, %v2590
        %2592 = vmatmul.f32.gmra.mxu0 %v2462
        %v2593 = vpop.f32.mrf.mxu0
        %v2594 = vadd.f32 %v2541, %v2593
        %2595 = vmatmul.f32.gmra.mxu0 %v2477
        %v2596 = vpop.f32.mrf.mxu0
        %v2597 = vadd.f32 %v2541, %v2596
        %2598 = vmatmul.f32.gmra.mxu0 %v2492
        %v2599 = vpop.f32.mrf.mxu0
        %v2600 = vadd.f32 %v2541, %v2599
        %2601 = vmatmul.f32.gmra.mxu0 %v2507
        %v2602 = vpop.f32.mrf.mxu0
        %v2603 = vadd.f32 %v2541, %v2602
        %2604 = vmatmul.f32.gmra.mxu0 %v2522
        %v2605 = vpop.f32.mrf.mxu0
        %v2606 = vadd.f32 %v2541, %v2605
        %2607 = vdwg.mxu0
        %2608 = vst [vmem:[%s559] sm:$0xff] %v2561
        %2609 = vst [vmem:[%s559 + $0x8] sm:$0xff] %v2564
        %2610 = vst [vmem:[%s559 + $0x10] sm:$0xff] %v2567
        %2611 = vst [vmem:[%s559 + $0x18] sm:$0xff] %v2570
        %2612 = vst [vmem:[%s559 + $0x20] sm:$0xff] %v2573
        %2613 = vst [vmem:[%s559 + $0x28] sm:$0xff] %v2576
        %2614 = vst [vmem:[%s559 + $0x30] sm:$0xff] %v2579
        %2615 = vst [vmem:[%s559 + $0x38] sm:$0xff] %v2582
        %2616 = vst [vmem:[%s559 + $0x40] sm:$0xff] %v2585
        %2617 = vst [vmem:[%s559 + $0x48] sm:$0xff] %v2588
        %2618 = vst [vmem:[%s559 + $0x50] sm:$0xff] %v2591
        %2619 = vst [vmem:[%s559 + $0x58] sm:$0xff] %v2594
        %2620 = vst [vmem:[%s559 + $0x60] sm:$0xff] %v2597
        %2621 = vst [vmem:[%s559 + $0x68] sm:$0xff] %v2600
        %2622 = vst [vmem:[%s559 + $0x70] sm:$0xff] %v2603
        %2623 = vst [vmem:[%s559 + $0x78] sm:$0xff] %v2606
        %s2624 = sand.u32 %s319, 1
        %s2625 = scalar_lea.sflag [#allocation4], %s2624
        %s2626 = sand.u32 %s319, 1
        %s2627 = smul.addr %s2626, 128
        %s2628 = scalar_lea.vmem [#allocation14], %s2627
        // Predicated region
        $region101: #{tpu_custom_call.1} parent=71 // pred_check
          %p2629 = pneg %p329
        $region102: #{tpu_custom_call.1} parent=71 // pred_check_branch
          %2631 = sbr.rel (%p2629) target = $region104
        $region103: #{tpu_custom_call.1} parent=71 // pred_region
          %s2632 = smul.u32 16, %s33
          %2634 = vsyncadd %s2625, 0
          %s2635 = smul.addr %s2632, 8
          %s2636 = scalar_lea.hbm %s13, %s2635
          %s2637 = sshll.u32 %s2628, 4
          %s2638 = int_to_ptr.vmem [resolvable:$true] %s2637
          %s2639 = sshll.u32 %s2636, 4
          %s2640 = int_to_ptr.hbm [resolvable:$true] %s2639
          %2645 = dma.vmem_to_hbm [thread:$0]  %s2638, 2048, %s2640, %s2625, 128, 128, 8
        $region104: #{tpu_custom_call.1} parent=71 // pred_fallthru
          _
      $region72: #{tpu_custom_call.1} parent=5 // pred_fallthru
        _
      %p2646 = scmp.le.s32.totalorder 2, %s28
      // Predicated region
      $region105: #{tpu_custom_call.1} parent=5 // pred_check
        %p2647 = pneg %p2646
      $region106: #{tpu_custom_call.1} parent=5 // pred_check_branch
        %2649 = sbr.rel (%p2647) target = $region108
      $region107: #{tpu_custom_call.1} parent=5 // pred_region
        %s2650 = ssub.s32 %s28, 2
        // Predicated region
        $region109: #{tpu_custom_call.1} parent=107 // pred_check
          %p2651 = pneg %p335
        $region110: #{tpu_custom_call.1} parent=107 // pred_check_branch
          %2653 = sbr.rel (%p2651) target = $region112
        $region111: #{tpu_custom_call.1} parent=107 // pred_region
          %s2654 = sand.u32 %s320, 1
          %s2655 = scalar_lea.sflag [#allocation4], %s2654
          %s2656 = sand.u32 %s320, 1
          %s2657 = smul.addr %s2656, 128
          %s2658 = scalar_lea.vmem [#allocation14], %s2657
          %2660 = dma.done %s2655, 2048
        $region112: #{tpu_custom_call.1} parent=107 // pred_fallthru
          _
      $region108: #{tpu_custom_call.1} parent=5 // pred_fallthru
        _
    $region6: #{tpu_custom_call.1} parent=1 // loop_footer
      %s32 = sadd.s32 1, %s28
    $region7: #{tpu_custom_call.1} parent=1 // loop_footer_branch
      %27 = sbr.rel target = $region3
    $region8: #{tpu_custom_call.1} parent=1 // loop_exit
      _
    %2661 = vsyncpa [#allocation3], 1
    %s2662 = scalar_lea.sflag [#allocation3], 1
    %2663 = vsyncpa %s2662, 1
    %2664 = vsyncpa [#allocation6], 1
    %2665 = vsyncpa [#allocation9], 1
    %2666 = vsyncpa [#allocation12], 1
    %2667 = vsyncpa [#allocation4], 1
    %s2668 = scalar_lea.sflag [#allocation4], 1
    %2669 = vsyncpa %s2668, 1

</llo_original>
